<compile_context>
chip_gen: v7x
topology: tpu7x:2x2x1
jax: 0.10.0
libtpu: 0.0.40
codegen_flags: <defaults>
</compile_context>

<pallas_src>
import functools

import jax
import jax.numpy as jnp
from jax import lax
from jax.experimental import pallas as pl
from jax.experimental.pallas import tpu as pltpu

OUT_PAD = 128  # per-quantity lane padding for the mu/logvar head


def _gaussian_lstm_kernel(
    # fully VMEM-resident inputs
    x_ref,      # [T, Bp, I]       f32  input sequence
    eps_ref,    # [T, Bp, OP]      f32  N(0,1) noise (zero-padded to OP lanes)
    we_ref,     # [I, H]           bf16 embed weight (transposed)
    be_ref,     # [1, H]           f32  embed bias
    wl_ref,     # [L, 2H, 4H]      bf16 fused [w_ih ; w_hh] LSTM weights
    bl_ref,     # [L, 1, 4H]       f32  combined b_ih + b_hh
    wh_ref,     # [H, 2*OP]        bf16 padded [w_mu | w_logvar]
    bh_ref,     # [1, 2*OP]        f32  padded [b_mu | b_logvar]
    h0_ref,     # [L, Bp, H]       f32  initial hidden state
    c0_ref,     # [L, Bp, H]       f32  initial cell state
    # outputs
    zml_ref,    # [T, Bp, 3*OP]    f32  packed z | mu | logvar (lane-dense)
    hout_ref,   # [L, Bp, H]       f32  final hidden state (aliased with h0)
    cout_ref,   # [L, Bp, H]       f32  final cell state   (aliased with c0)
    # scratch
    hcat_ref,   # [Bp, 2H]         bf16 persistent MXU LHS buffer
    *,
    n_layers: int,
    hidden_size: int,
    out_pad: int,
    seq_len: int,
):
    H = hidden_size
    OP = out_pad

    # Initialize the resident state blocks once (single grid step).
    hout_ref[...] = h0_ref[...]
    cout_ref[...] = c0_ref[...]

    def step(t, carry):
        # --- embed: Linear(input_size -> hidden_size) -------------------------
        x = x_ref[t]                                         # [Bp, I] f32
        h_in = (
            jnp.dot(x.astype(jnp.bfloat16), we_ref[...],
                    preferred_element_type=jnp.float32)
            + be_ref[...]
        )                                                    # [Bp, H] f32

        # --- stacked LSTMCell layers (static unroll, fused K=2H matmul) -------
        for layer in range(n_layers):
            h_prev = hout_ref[layer]                         # [Bp, H] f32
            c_prev = cout_ref[layer]                         # [Bp, H] f32
            # persistent bf16 scratch instead of per-layer concatenate:
            hcat_ref[:, :H] = h_in.astype(jnp.bfloat16)      # lane-aligned
            hcat_ref[:, H:] = h_prev.astype(jnp.bfloat16)    # lane-aligned
            gates = (
                jnp.dot(hcat_ref[...], wl_ref[layer],
                        preferred_element_type=jnp.float32)
                + bl_ref[layer]
            )                                                # [Bp, 4H] f32
            i_g = jax.nn.sigmoid(gates[:, 0 * H:1 * H])
            f_g = jax.nn.sigmoid(gates[:, 1 * H:2 * H])
            g_g = jnp.tanh(gates[:, 2 * H:3 * H])
            o_g = jax.nn.sigmoid(gates[:, 3 * H:4 * H])
            c_new = f_g * c_prev + i_g * g_g
            h_new = o_g * jnp.tanh(c_new)
            hout_ref[layer] = h_new
            cout_ref[layer] = c_new
            h_in = h_new

        # --- fused, lane-padded mu/logvar head + reparameterization -----------
        head = (
            jnp.dot(h_in.astype(jnp.bfloat16), wh_ref[...],
                    preferred_element_type=jnp.float32)
            + bh_ref[...]
        )                                                    # [Bp, 2*OP]
        mu = head[:, :OP]                                    # lanes 0:128
        lv = head[:, OP:]                                    # lanes 128:256
        z = eps_ref[t] * jnp.exp(0.5 * lv) + mu              # [Bp, OP]

        # Single lane-dense store: lanes [0:OP)=z, [OP:2OP)=mu, [2OP:3OP)=logvar.
        zml_ref[t] = jnp.concatenate([z, head], axis=-1)     # [Bp, 3*OP]
        return carry

    lax.fori_loop(0, seq_len, step, 0)


def gaussian_lstm_forward(x_seq, params, hidden, eps_seq, *,
                          n_layers, hidden_size, output_size):
    """Runs T timesteps of the gaussian_lstm forward pass in one Pallas call.

    x_seq:   [T, B, input_size]   f32
    eps_seq: [T, B, output_size]  f32 (N(0,1) noise, passed in for determinism)
    params:  packed dict (see _pack_params), weights bf16, biases f32
    hidden:  {"h": [L, B, H], "c": [L, B, H]} f32 initial state

    Returns (z, mu, logvar) each [T, B, output_size], plus (h_new, c_new).
    T=1 reproduces exactly one call of the PyTorch module's forward().
    """
    T, B, I = x_seq.shape
    H, L, O = hidden_size, n_layers, output_size
    OP = OUT_PAD
    # Pad batch to >=16 rows so bf16 MXU operands fill whole sublane tiles.
    Bp = max(16, ((B + 15) // 16) * 16)

    x_p = jnp.pad(x_seq, ((0, 0), (0, Bp - B), (0, 0))) if Bp != B else x_seq
    eps_p = jnp.zeros((T, Bp, OP), jnp.float32).at[:, :B, :O].set(eps_seq)
    h0_p = jnp.pad(hidden["h"], ((0, 0), (0, Bp - B), (0, 0))) if Bp != B else hidden["h"]
    c0_p = jnp.pad(hidden["c"], ((0, 0), (0, Bp - B), (0, 0))) if Bp != B else hidden["c"]

    kernel = functools.partial(
        _gaussian_lstm_kernel,
        n_layers=L, hidden_size=H, out_pad=OP, seq_len=T,
    )

    # Advisory cost estimate for XLA's scheduler.
    flops = T * 2 * (Bp * I * H + L * Bp * (2 * H) * (4 * H) + Bp * H * (2 * OP))
    transcendentals = T * (L * Bp * H * 5 + Bp * OP)
    weight_bytes = sum(int(v.size) * v.dtype.itemsize for v in params.values())
    act_bytes = (x_p.size + eps_p.size + T * Bp * 3 * OP) * 4
    state_bytes = 4 * (L * Bp * H) * 4
    cost = pl.CostEstimate(
        flops=flops,
        transcendentals=transcendentals,
        bytes_accessed=weight_bytes + act_bytes + state_bytes,
    )

    out_shape = (
        jax.ShapeDtypeStruct((T, Bp, 3 * OP), jnp.float32),   # packed z|mu|logvar
        jax.ShapeDtypeStruct((L, Bp, H), jnp.float32),        # h_new
        jax.ShapeDtypeStruct((L, Bp, H), jnp.float32),        # c_new
    )

    zml, h_new, c_new = pl.pallas_call(
        kernel,
        out_shape=out_shape,
        grid=(1,),
        in_specs=[
            pl.BlockSpec((T, Bp, I), lambda i: (0, 0, 0)),          # x (resident)
            pl.BlockSpec((T, Bp, OP), lambda i: (0, 0, 0)),         # eps (resident)
            pl.BlockSpec((I, H), lambda i: (0, 0)),                 # w_embed
            pl.BlockSpec((1, H), lambda i: (0, 0)),                 # b_embed
            pl.BlockSpec((L, 2 * H, 4 * H), lambda i: (0, 0, 0)),   # w_lstm
            pl.BlockSpec((L, 1, 4 * H), lambda i: (0, 0, 0)),       # b_lstm
            pl.BlockSpec((H, 2 * OP), lambda i: (0, 0)),            # w_head
            pl.BlockSpec((1, 2 * OP), lambda i: (0, 0)),            # b_head
            pl.BlockSpec((L, Bp, H), lambda i: (0, 0, 0)),          # h0
            pl.BlockSpec((L, Bp, H), lambda i: (0, 0, 0)),          # c0
        ],
        out_specs=(
            pl.BlockSpec((T, Bp, 3 * OP), lambda i: (0, 0, 0)),     # z|mu|logvar
            pl.BlockSpec((L, Bp, H), lambda i: (0, 0, 0)),          # h state
            pl.BlockSpec((L, Bp, H), lambda i: (0, 0, 0)),          # c state
        ),
        scratch_shapes=[pltpu.VMEM((Bp, 2 * H), jnp.bfloat16)],     # hcat buffer
        input_output_aliases={8: 1, 9: 2},                          # h0->h_new, c0->c_new
        compiler_params=pltpu.CompilerParams(
            dimension_semantics=("arbitrary",),
            vmem_limit_bytes=4 * 1024 * 1024,
        ),
        cost_estimate=cost,
    )(
        x_p, eps_p,
        params["w_embed"], params["b_embed"],
        params["w_lstm"], params["b_lstm"],
        params["w_head"], params["b_head"],
        h0_p, c0_p,
    )

    z = zml[:, :B, 0:O]
    mu = zml[:, :B, OP:OP + O]
    lv = zml[:, :B, 2 * OP:2 * OP + O]
    return z, mu, lv, h_new[:, :B], c_new[:, :B]


def _init_params(key, input_size, output_size, hidden_size, n_layers):
    """Deterministic uniform(+-1/sqrt(fan_in)) init, PyTorch-style semantics but
    stored transposed as [in, out], all float32 (the 'raw' reference params)."""
    I, O, H, L = input_size, output_size, hidden_size, n_layers
    ks = jax.random.split(key, 10)

    def u(k, shape, fan_in):
        bound = 1.0 / jnp.sqrt(fan_in)
        return jax.random.uniform(k, shape, jnp.float32, -bound, bound)

    return {
        "w_embed":  u(ks[0], (I, H), I),
        "b_embed":  u(ks[1], (1, H), I),
        "w_ih":     u(ks[2], (L, H, 4 * H), H),
        "w_hh":     u(ks[3], (L, H, 4 * H), H),
        "b_lstm":   u(ks[4], (L, 1, 4 * H), H) + u(ks[5], (L, 1, 4 * H), H),
        "w_mu":     u(ks[6], (H, O), H),
        "b_mu":     u(ks[7], (1, O), H),
        "w_logvar": u(ks[8], (H, O), H),
        "b_logvar": u(ks[9], (1, O), H),
    }


def _pack_params(raw, out_pad=OUT_PAD):
    """Pack raw f32 params into the fused / lane-padded / bf16 kernel layout."""
    H, O = raw["w_mu"].shape
    w_head = jnp.zeros((H, 2 * out_pad), jnp.float32)
    w_head = w_head.at[:, :O].set(raw["w_mu"])
    w_head = w_head.at[:, out_pad:out_pad + O].set(raw["w_logvar"])
    b_head = jnp.zeros((1, 2 * out_pad), jnp.float32)
    b_head = b_head.at[:, :O].set(raw["b_mu"])
    b_head = b_head.at[:, out_pad:out_pad + O].set(raw["b_logvar"])
    return {
        "w_embed": raw["w_embed"].astype(jnp.bfloat16),
        "b_embed": raw["b_embed"],
        # [w_ih ; w_hh] stacked along K -> [L, 2H, 4H]
        "w_lstm": jnp.concatenate([raw["w_ih"], raw["w_hh"]], axis=1).astype(jnp.bfloat16),
        "b_lstm": raw["b_lstm"],
        # lane-padded [w_mu | w_logvar] -> [H, 2*OP]
        "w_head": w_head.astype(jnp.bfloat16),
        "b_head": b_head,
    }


def _reference_packed(x_seq, packed, hidden, eps_seq, n_layers, hidden_size,
                      output_size, out_pad=OUT_PAD):
    """Pure-JAX reference with the SAME numerics as the kernel (bf16 weights,
    bf16 matmul operands, f32 accumulation, lane-padded head)."""
    H, O, OP = hidden_size, output_size, out_pad
    h, c = hidden["h"], hidden["c"]
    zs, mus, lvs = [], [], []
    for t in range(x_seq.shape[0]):
        h_in = (jnp.dot(x_seq[t].astype(jnp.bfloat16), packed["w_embed"],
                        preferred_element_type=jnp.float32) + packed["b_embed"])
        new_h, new_c = [], []
        for layer in range(n_layers):
            hcat = jnp.concatenate([h_in, h[layer]], axis=-1).astype(jnp.bfloat16)
            gates = (jnp.dot(hcat, packed["w_lstm"][layer],
                             preferred_element_type=jnp.float32) + packed["b_lstm"][layer])
            i_g = jax.nn.sigmoid(gates[:, 0 * H:1 * H])
            f_g = jax.nn.sigmoid(gates[:, 1 * H:2 * H])
            g_g = jnp.tanh(gates[:, 2 * H:3 * H])
            o_g = jax.nn.sigmoid(gates[:, 3 * H:4 * H])
            c_new = f_g * c[layer] + i_g * g_g
            h_new = o_g * jnp.tanh(c_new)
            new_h.append(h_new)
            new_c.append(c_new)
            h_in = h_new
        h, c = jnp.stack(new_h), jnp.stack(new_c)
        head = (jnp.dot(h_in.astype(jnp.bfloat16), packed["w_head"],
                        preferred_element_type=jnp.float32) + packed["b_head"])
        mu, lv = head[:, :O], head[:, OP:OP + O]
        zs.append(eps_seq[t] * jnp.exp(0.5 * lv) + mu)
        mus.append(mu)
        lvs.append(lv)
    return jnp.stack(zs), jnp.stack(mus), jnp.stack(lvs), h, c


def _reference_f32(x_seq, raw, hidden, eps_seq, n_layers, hidden_size, output_size):
    """Full-precision f32 reference (PyTorch-equivalent math)."""
    H, O = hidden_size, output_size
    h, c = hidden["h"], hidden["c"]
    zs, mus, lvs = [], [], []
    for t in range(x_seq.shape[0]):
        h_in = x_seq[t] @ raw["w_embed"] + raw["b_embed"]
        new_h, new_c = [], []
        for layer in range(n_layers):
            gates = (h_in @ raw["w_ih"][layer] + h[layer] @ raw["w_hh"][layer]
                     + raw["b_lstm"][layer])
            i_g = jax.nn.sigmoid(gates[:, 0 * H:1 * H])
            f_g = jax.nn.sigmoid(gates[:, 1 * H:2 * H])
            g_g = jnp.tanh(gates[:, 2 * H:3 * H])
            o_g = jax.nn.sigmoid(gates[:, 3 * H:4 * H])
            c_new = f_g * c[layer] + i_g * g_g
            h_new = o_g * jnp.tanh(c_new)
            new_h.append(h_new)
            new_c.append(c_new)
            h_in = h_new
        h, c = jnp.stack(new_h), jnp.stack(new_c)
        mu = h_in @ raw["w_mu"] + raw["b_mu"]
        lv = h_in @ raw["w_logvar"] + raw["b_logvar"]
        zs.append(eps_seq[t] * jnp.exp(0.5 * lv) + mu)
        mus.append(mu)
        lvs.append(lv)
    return jnp.stack(zs), jnp.stack(mus), jnp.stack(lvs), h, c


if __name__ == "__main__":
    # Small, TPU-friendly shapes consistent with the module (SVG prior/posterior
    # style). All T timesteps are rolled through one pallas_call with resident
    # weights and an in-kernel fori_loop over time.
    batch_size = 8
    input_size = 32
    hidden_size = 128
    output_size = 16
    n_layers = 2
    T = 4

    root = jax.random.PRNGKey(0)
    k_param, k_x, k_eps = jax.random.split(root, 3)

    raw_params = _init_params(k_param, input_size, output_size, hidden_size, n_layers)
    params = _pack_params(raw_params)

    x_seq = jax.random.normal(k_x, (T, batch_size, input_size), jnp.float32)
    eps_seq = jax.random.normal(k_eps, (T, batch_size, output_size), jnp.float32)
    # init_hidden(): zeros for every layer's (h, c). Separate copies for the
    # kernel call (whose h0/c0 are aliased to the state outputs) and references.
    hidden = {
        "h": jnp.zeros((n_layers, batch_size, hidden_size), jnp.float32),
        "c": jnp.zeros((n_layers, batch_size, hidden_size), jnp.float32),
    }
    hidden_ref = {
        "h": jnp.zeros((n_layers, batch_size, hidden_size), jnp.float32),
        "c": jnp.zeros((n_layers, batch_size, hidden_size), jnp.float32),
    }

    z, mu, logvar, h_new, c_new = jax.block_until_ready(
        gaussian_lstm_forward(
            x_seq, params, hidden, eps_seq,
            n_layers=n_layers, hidden_size=hidden_size, output_size=output_size,
        )
    )

    # 1) Exact-numerics reference (bf16 weights, f32 accumulation) — tight check,
    #    including the hidden/cell state outputs.
    z_r, mu_r, lv_r, h_r, c_r = _reference_packed(
        x_seq, params, hidden_ref, eps_seq, n_layers, hidden_size, output_size)
    assert jnp.allclose(z, z_r, atol=2e-3, rtol=2e-3)
    assert jnp.allclose(mu, mu_r, atol=2e-3, rtol=2e-3)
    assert jnp.allclose(logvar, lv_r, atol=2e-3, rtol=2e-3)
    assert jnp.allclose(h_new, h_r, atol=2e-3, rtol=2e-3)
    assert jnp.allclose(c_new, c_r, atol=2e-3, rtol=2e-3)

    # 2) Full-f32 reference — loose check (bf16 weight rounding is the only delta;
    #    rounding compounds with T, tolerance validated at T=4).
    z_f, mu_f, lv_f, h_f, c_f = _reference_f32(
        x_seq, raw_params, hidden_ref, eps_seq, n_layers, hidden_size, output_size)
    assert jnp.allclose(mu, mu_f, atol=1.5e-1, rtol=1.5e-1)
    assert jnp.allclose(logvar, lv_f, atol=1.5e-1, rtol=1.5e-1)
    assert jnp.allclose(h_new, h_f, atol=1.5e-1, rtol=1.5e-1)
    assert jnp.allclose(c_new, c_f, atol=1.5e-1, rtol=1.5e-1)

    print("KERNEL_OK")
</pallas_src>

<mosaic_0001>
module attributes {stable_mosaic.version = 11 : i64} {
  func.func @_gaussian_lstm_kernel(%arg0: i32, %arg1: memref<4x16x32xf32, #tpu.memory_space<vmem>>, %arg2: memref<4x16x128xf32, #tpu.memory_space<vmem>>, %arg3: memref<32x128xbf16, #tpu.memory_space<vmem>>, %arg4: memref<1x128xf32, #tpu.memory_space<vmem>>, %arg5: memref<2x256x512xbf16, #tpu.memory_space<vmem>>, %arg6: memref<2x1x512xf32, #tpu.memory_space<vmem>>, %arg7: memref<128x256xbf16, #tpu.memory_space<vmem>>, %arg8: memref<1x256xf32, #tpu.memory_space<vmem>>, %arg9: memref<2x16x128xf32, #tpu.memory_space<vmem>>, %arg10: memref<2x16x128xf32, #tpu.memory_space<vmem>>, %arg11: memref<4x16x384xf32, #tpu.memory_space<vmem>>, %arg12: memref<2x16x128xf32, #tpu.memory_space<vmem>>, %arg13: memref<2x16x128xf32, #tpu.memory_space<vmem>>, %arg14: memref<16x256xbf16, #tpu.memory_space<vmem>>) attributes {dimension_semantics = [#tpu.dimension_semantics<arbitrary>], iteration_bounds = array<i64: 1>, scalar_prefetch = 0 : i64, scratch_operands = 1 : i64, tpu.core_type = #tpu.core_type<tc>, window_params = [{pipeline_mode = #tpu.pipeline_mode<synchronous>, transform_indices = @transform_0, window_bounds = array<i64: 4, 16, 32>}, {pipeline_mode = #tpu.pipeline_mode<synchronous>, transform_indices = @transform_1, window_bounds = array<i64: 4, 16, 128>}, {pipeline_mode = #tpu.pipeline_mode<synchronous>, transform_indices = @transform_2, window_bounds = array<i64: 32, 128>}, {pipeline_mode = #tpu.pipeline_mode<synchronous>, transform_indices = @transform_3, window_bounds = array<i64: 1, 128>}, {pipeline_mode = #tpu.pipeline_mode<synchronous>, transform_indices = @transform_4, window_bounds = array<i64: 2, 256, 512>}, {pipeline_mode = #tpu.pipeline_mode<synchronous>, transform_indices = @transform_5, window_bounds = array<i64: 2, 1, 512>}, {pipeline_mode = #tpu.pipeline_mode<synchronous>, transform_indices = @transform_6, window_bounds = array<i64: 128, 256>}, {pipeline_mode = #tpu.pipeline_mode<synchronous>, transform_indices = @transform_7, window_bounds = array<i64: 1, 256>}, {pipeline_mode = #tpu.pipeline_mode<synchronous>, transform_indices = @transform_8, window_bounds = array<i64: 2, 16, 128>}, {pipeline_mode = #tpu.pipeline_mode<synchronous>, transform_indices = @transform_9, window_bounds = array<i64: 2, 16, 128>}, {pipeline_mode = #tpu.pipeline_mode<synchronous>, transform_indices = @transform_10, window_bounds = array<i64: 4, 16, 384>}, {pipeline_mode = #tpu.pipeline_mode<synchronous>, transform_indices = @transform_11, window_bounds = array<i64: 2, 16, 128>}, {pipeline_mode = #tpu.pipeline_mode<synchronous>, transform_indices = @transform_12, window_bounds = array<i64: 2, 16, 128>}]} {
    %c0 = arith.constant 0 : index
    %c0_0 = arith.constant 0 : index
    %c0_1 = arith.constant 0 : index
    %0 = vector.load %arg9[%c0, %c0_0, %c0_1] : memref<2x16x128xf32, #tpu.memory_space<vmem>>, vector<2x16x128xf32>
    %c0_2 = arith.constant 0 : index
    %c0_3 = arith.constant 0 : index
    %c0_4 = arith.constant 0 : index
    %1 = vector.load %arg12[%c0_2, %c0_3, %c0_4] : memref<2x16x128xf32, #tpu.memory_space<vmem>>, vector<2x16x128xf32>
    tpu.vector_store %arg12[%c0_2, %c0_3, %c0_4], %0 {strides = array<i32>} : memref<2x16x128xf32, #tpu.memory_space<vmem>>, vector<2x16x128xf32>,
    %c0_5 = arith.constant 0 : index
    %c0_6 = arith.constant 0 : index
    %c0_7 = arith.constant 0 : index
    %2 = vector.load %arg10[%c0_5, %c0_6, %c0_7] : memref<2x16x128xf32, #tpu.memory_space<vmem>>, vector<2x16x128xf32>
    %c0_8 = arith.constant 0 : index
    %c0_9 = arith.constant 0 : index
    %c0_10 = arith.constant 0 : index
    %3 = vector.load %arg13[%c0_8, %c0_9, %c0_10] : memref<2x16x128xf32, #tpu.memory_space<vmem>>, vector<2x16x128xf32>
    tpu.vector_store %arg13[%c0_8, %c0_9, %c0_10], %2 {strides = array<i32>} : memref<2x16x128xf32, #tpu.memory_space<vmem>>, vector<2x16x128xf32>,
    %c0_i32 = arith.constant 0 : i32
    %c4_i32 = arith.constant 4 : i32
    %4 = arith.addi %c0_i32, %c4_i32 : i32
    %c1_i32 = arith.constant 1 : i32
    scf.for %arg15 = %c0_i32 to %4 step %c1_i32  : i32 {
      %5 = arith.index_cast %arg15 : i32 to index
      %c0_12 = arith.constant 0 : index
      %c0_13 = arith.constant 0 : index
      %6 = vector.load %arg1[%5, %c0_12, %c0_13] : memref<4x16x32xf32, #tpu.memory_space<vmem>>, vector<1x16x32xf32>
      %7 = vector.shape_cast %6 : vector<1x16x32xf32> to vector<16x32xf32>
      %8 = arith.truncf %7 : vector<16x32xf32> to vector<16x32xbf16>
      %c0_14 = arith.constant 0 : index
      %c0_15 = arith.constant 0 : index
      %9 = vector.load %arg3[%c0_14, %c0_15] : memref<32x128xbf16, #tpu.memory_space<vmem>>, vector<32x128xbf16>
      %cst = arith.constant dense<0.000000e+00> : vector<16x128xf32>
      %10 = tpu.matmul %8, %9, %cst {dimension_numbers = #tpu.dot_dimension_numbers<[1], [0], [0], [1], [0, 0, 1, 1], [], []>} : vector<16x32xbf16>, vector<32x128xbf16>, vector<16x128xf32> -> vector<16x128xf32>
      %c0_16 = arith.constant 0 : index
      %c0_17 = arith.constant 0 : index
      %11 = vector.load %arg4[%c0_16, %c0_17] : memref<1x128xf32, #tpu.memory_space<vmem>>, vector<1x128xf32>
      %12 = vector.broadcast %11 : vector<1x128xf32> to vector<16x128xf32>
      %13 = arith.addf %10, %12 : vector<16x128xf32>
      %c0_18 = arith.constant 0 : index
      %c0_19 = arith.constant 0 : index
      %c0_20 = arith.constant 0 : index
      %14 = vector.load %arg12[%c0_18, %c0_19, %c0_20] : memref<2x16x128xf32, #tpu.memory_space<vmem>>, vector<1x16x128xf32>
      %15 = vector.shape_cast %14 : vector<1x16x128xf32> to vector<16x128xf32>
      %c0_21 = arith.constant 0 : index
      %c0_22 = arith.constant 0 : index
      %c0_23 = arith.constant 0 : index
      %16 = vector.load %arg13[%c0_21, %c0_22, %c0_23] : memref<2x16x128xf32, #tpu.memory_space<vmem>>, vector<1x16x128xf32>
      %17 = vector.shape_cast %16 : vector<1x16x128xf32> to vector<16x128xf32>
      %18 = arith.truncf %13 : vector<16x128xf32> to vector<16x128xbf16>
      %c0_24 = arith.constant 0 : index
      %c0_25 = arith.constant 0 : index
      %19 = vector.load %arg14[%c0_24, %c0_25] : memref<16x256xbf16, #tpu.memory_space<vmem>>, vector<16x128xbf16>
      tpu.vector_store %arg14[%c0_24, %c0_25], %18 {strides = array<i32>} : memref<16x256xbf16, #tpu.memory_space<vmem>>, vector<16x128xbf16>,
      %20 = arith.truncf %15 : vector<16x128xf32> to vector<16x128xbf16>
      %c0_26 = arith.constant 0 : index
      %c128 = arith.constant 128 : index
      %21 = vector.load %arg14[%c0_26, %c128] : memref<16x256xbf16, #tpu.memory_space<vmem>>, vector<16x128xbf16>
      tpu.vector_store %arg14[%c0_26, %c128], %20 {strides = array<i32>} : memref<16x256xbf16, #tpu.memory_space<vmem>>, vector<16x128xbf16>,
      %c0_27 = arith.constant 0 : index
      %c0_28 = arith.constant 0 : index
      %22 = vector.load %arg14[%c0_27, %c0_28] : memref<16x256xbf16, #tpu.memory_space<vmem>>, vector<16x256xbf16>
      %c0_29 = arith.constant 0 : index
      %c0_30 = arith.constant 0 : index
      %c0_31 = arith.constant 0 : index
      %23 = vector.load %arg5[%c0_29, %c0_30, %c0_31] : memref<2x256x512xbf16, #tpu.memory_space<vmem>>, vector<1x256x512xbf16>
      %24 = vector.shape_cast %23 : vector<1x256x512xbf16> to vector<256x512xbf16>
      %cst_32 = arith.constant dense<0.000000e+00> : vector<16x512xf32>
      %25 = tpu.matmul %22, %24, %cst_32 {dimension_numbers = #tpu.dot_dimension_numbers<[1], [0], [0], [1], [0, 0, 1, 1], [], []>} : vector<16x256xbf16>, vector<256x512xbf16>, vector<16x512xf32> -> vector<16x512xf32>
      %c0_33 = arith.constant 0 : index
      %c0_34 = arith.constant 0 : index
      %c0_35 = arith.constant 0 : index
      %26 = vector.load %arg6[%c0_33, %c0_34, %c0_35] : memref<2x1x512xf32, #tpu.memory_space<vmem>>, vector<1x1x512xf32>
      %27 = vector.shape_cast %26 : vector<1x1x512xf32> to vector<1x512xf32>
      %28 = vector.broadcast %27 : vector<1x512xf32> to vector<16x512xf32>
      %29 = arith.addf %25, %28 : vector<16x512xf32>
      %30 = vector.extract_strided_slice %29 {offsets = [0, 0], sizes = [16, 128], strides = [1, 1]} : vector<16x512xf32> to vector<16x128xf32>
      %31 = arith.negf %30 : vector<16x128xf32>
      %32 = math.exp %31 : vector<16x128xf32>
      %cst_36 = arith.constant 1.000000e+00 : f32
      %33 = vector.broadcast %cst_36 : f32 to vector<16x128xf32>
      %34 = arith.addf %33, %32 : vector<16x128xf32>
      %35 = arith.divf %33, %34 : vector<16x128xf32>
      %36 = vector.extract_strided_slice %29 {offsets = [0, 128], sizes = [16, 128], strides = [1, 1]} : vector<16x512xf32> to vector<16x128xf32>
      %37 = arith.negf %36 : vector<16x128xf32>
      %38 = math.exp %37 : vector<16x128xf32>
      %cst_37 = arith.constant 1.000000e+00 : f32
      %39 = vector.broadcast %cst_37 : f32 to vector<16x128xf32>
      %40 = arith.addf %39, %38 : vector<16x128xf32>
      %41 = arith.divf %39, %40 : vector<16x128xf32>
      %42 = vector.extract_strided_slice %29 {offsets = [0, 256], sizes = [16, 128], strides = [1, 1]} : vector<16x512xf32> to vector<16x128xf32>
      %43 = math.tanh %42 : vector<16x128xf32>
      %44 = vector.extract_strided_slice %29 {offsets = [0, 384], sizes = [16, 128], strides = [1, 1]} : vector<16x512xf32> to vector<16x128xf32>
      %45 = arith.negf %44 : vector<16x128xf32>
      %46 = math.exp %45 : vector<16x128xf32>
      %cst_38 = arith.constant 1.000000e+00 : f32
      %47 = vector.broadcast %cst_38 : f32 to vector<16x128xf32>
      %48 = arith.addf %47, %46 : vector<16x128xf32>
      %49 = arith.divf %47, %48 : vector<16x128xf32>
      %50 = arith.mulf %41, %17 : vector<16x128xf32>
      %51 = arith.mulf %35, %43 : vector<16x128xf32>
      %52 = arith.addf %50, %51 : vector<16x128xf32>
      %53 = math.tanh %52 : vector<16x128xf32>
      %54 = arith.mulf %49, %53 : vector<16x128xf32>
      %c0_39 = arith.constant 0 : index
      %c0_40 = arith.constant 0 : index
      %c0_41 = arith.constant 0 : index
      %55 = vector.load %arg12[%c0_39, %c0_40, %c0_41] : memref<2x16x128xf32, #tpu.memory_space<vmem>>, vector<1x16x128xf32>
      %56 = vector.shape_cast %55 : vector<1x16x128xf32> to vector<16x128xf32>
      %57 = vector.shape_cast %54 : vector<16x128xf32> to vector<1x16x128xf32>
      tpu.vector_store %arg12[%c0_39, %c0_40, %c0_41], %57 {strides = array<i32>} : memref<2x16x128xf32, #tpu.memory_space<vmem>>, vector<1x16x128xf32>,
      %c0_42 = arith.constant 0 : index
      %c0_43 = arith.constant 0 : index
      %c0_44 = arith.constant 0 : index
      %58 = vector.load %arg13[%c0_42, %c0_43, %c0_44] : memref<2x16x128xf32, #tpu.memory_space<vmem>>, vector<1x16x128xf32>
      %59 = vector.shape_cast %58 : vector<1x16x128xf32> to vector<16x128xf32>
      %60 = vector.shape_cast %52 : vector<16x128xf32> to vector<1x16x128xf32>
      tpu.vector_store %arg13[%c0_42, %c0_43, %c0_44], %60 {strides = array<i32>} : memref<2x16x128xf32, #tpu.memory_space<vmem>>, vector<1x16x128xf32>,
      %c1 = arith.constant 1 : index
      %c0_45 = arith.constant 0 : index
      %c0_46 = arith.constant 0 : index
      %61 = vector.load %arg12[%c1, %c0_45, %c0_46] : memref<2x16x128xf32, #tpu.memory_space<vmem>>, vector<1x16x128xf32>
      %62 = vector.shape_cast %61 : vector<1x16x128xf32> to vector<16x128xf32>
      %c1_47 = arith.constant 1 : index
      %c0_48 = arith.constant 0 : index
      %c0_49 = arith.constant 0 : index
      %63 = vector.load %arg13[%c1_47, %c0_48, %c0_49] : memref<2x16x128xf32, #tpu.memory_space<vmem>>, vector<1x16x128xf32>
      %64 = vector.shape_cast %63 : vector<1x16x128xf32> to vector<16x128xf32>
      %65 = arith.truncf %54 : vector<16x128xf32> to vector<16x128xbf16>
      %c0_50 = arith.constant 0 : index
      %c0_51 = arith.constant 0 : index
      %66 = vector.load %arg14[%c0_50, %c0_51] : memref<16x256xbf16, #tpu.memory_space<vmem>>, vector<16x128xbf16>
      tpu.vector_store %arg14[%c0_50, %c0_51], %65 {strides = array<i32>} : memref<16x256xbf16, #tpu.memory_space<vmem>>, vector<16x128xbf16>,
      %67 = arith.truncf %62 : vector<16x128xf32> to vector<16x128xbf16>
      %c0_52 = arith.constant 0 : index
      %c128_53 = arith.constant 128 : index
      %68 = vector.load %arg14[%c0_52, %c128_53] : memref<16x256xbf16, #tpu.memory_space<vmem>>, vector<16x128xbf16>
      tpu.vector_store %arg14[%c0_52, %c128_53], %67 {strides = array<i32>} : memref<16x256xbf16, #tpu.memory_space<vmem>>, vector<16x128xbf16>,
      %c0_54 = arith.constant 0 : index
      %c0_55 = arith.constant 0 : index
      %69 = vector.load %arg14[%c0_54, %c0_55] : memref<16x256xbf16, #tpu.memory_space<vmem>>, vector<16x256xbf16>
      %c1_56 = arith.constant 1 : index
      %c0_57 = arith.constant 0 : index
      %c0_58 = arith.constant 0 : index
      %70 = vector.load %arg5[%c1_56, %c0_57, %c0_58] : memref<2x256x512xbf16, #tpu.memory_space<vmem>>, vector<1x256x512xbf16>
      %71 = vector.shape_cast %70 : vector<1x256x512xbf16> to vector<256x512xbf16>
      %cst_59 = arith.constant dense<0.000000e+00> : vector<16x512xf32>
      %72 = tpu.matmul %69, %71, %cst_59 {dimension_numbers = #tpu.dot_dimension_numbers<[1], [0], [0], [1], [0, 0, 1, 1], [], []>} : vector<16x256xbf16>, vector<256x512xbf16>, vector<16x512xf32> -> vector<16x512xf32>
      %c1_60 = arith.constant 1 : index
      %c0_61 = arith.constant 0 : index
      %c0_62 = arith.constant 0 : index
      %73 = vector.load %arg6[%c1_60, %c0_61, %c0_62] : memref<2x1x512xf32, #tpu.memory_space<vmem>>, vector<1x1x512xf32>
      %74 = vector.shape_cast %73 : vector<1x1x512xf32> to vector<1x512xf32>
      %75 = vector.broadcast %74 : vector<1x512xf32> to vector<16x512xf32>
      %76 = arith.addf %72, %75 : vector<16x512xf32>
      %77 = vector.extract_strided_slice %76 {offsets = [0, 0], sizes = [16, 128], strides = [1, 1]} : vector<16x512xf32> to vector<16x128xf32>
      %78 = arith.negf %77 : vector<16x128xf32>
      %79 = math.exp %78 : vector<16x128xf32>
      %cst_63 = arith.constant 1.000000e+00 : f32
      %80 = vector.broadcast %cst_63 : f32 to vector<16x128xf32>
      %81 = arith.addf %80, %79 : vector<16x128xf32>
      %82 = arith.divf %80, %81 : vector<16x128xf32>
      %83 = vector.extract_strided_slice %76 {offsets = [0, 128], sizes = [16, 128], strides = [1, 1]} : vector<16x512xf32> to vector<16x128xf32>
      %84 = arith.negf %83 : vector<16x128xf32>
      %85 = math.exp %84 : vector<16x128xf32>
      %cst_64 = arith.constant 1.000000e+00 : f32
      %86 = vector.broadcast %cst_64 : f32 to vector<16x128xf32>
      %87 = arith.addf %86, %85 : vector<16x128xf32>
      %88 = arith.divf %86, %87 : vector<16x128xf32>
      %89 = vector.extract_strided_slice %76 {offsets = [0, 256], sizes = [16, 128], strides = [1, 1]} : vector<16x512xf32> to vector<16x128xf32>
      %90 = math.tanh %89 : vector<16x128xf32>
      %91 = vector.extract_strided_slice %76 {offsets = [0, 384], sizes = [16, 128], strides = [1, 1]} : vector<16x512xf32> to vector<16x128xf32>
      %92 = arith.negf %91 : vector<16x128xf32>
      %93 = math.exp %92 : vector<16x128xf32>
      %cst_65 = arith.constant 1.000000e+00 : f32
      %94 = vector.broadcast %cst_65 : f32 to vector<16x128xf32>
      %95 = arith.addf %94, %93 : vector<16x128xf32>
      %96 = arith.divf %94, %95 : vector<16x128xf32>
      %97 = arith.mulf %88, %64 : vector<16x128xf32>
      %98 = arith.mulf %82, %90 : vector<16x128xf32>
      %99 = arith.addf %97, %98 : vector<16x128xf32>
      %100 = math.tanh %99 : vector<16x128xf32>
      %101 = arith.mulf %96, %100 : vector<16x128xf32>
      %c1_66 = arith.constant 1 : index
      %c0_67 = arith.constant 0 : index
      %c0_68 = arith.constant 0 : index
      %102 = vector.load %arg12[%c1_66, %c0_67, %c0_68] : memref<2x16x128xf32, #tpu.memory_space<vmem>>, vector<1x16x128xf32>
      %103 = vector.shape_cast %102 : vector<1x16x128xf32> to vector<16x128xf32>
      %104 = vector.shape_cast %101 : vector<16x128xf32> to vector<1x16x128xf32>
      tpu.vector_store %arg12[%c1_66, %c0_67, %c0_68], %104 {strides = array<i32>} : memref<2x16x128xf32, #tpu.memory_space<vmem>>, vector<1x16x128xf32>,
      %c1_69 = arith.constant 1 : index
      %c0_70 = arith.constant 0 : index
      %c0_71 = arith.constant 0 : index
      %105 = vector.load %arg13[%c1_69, %c0_70, %c0_71] : memref<2x16x128xf32, #tpu.memory_space<vmem>>, vector<1x16x128xf32>
      %106 = vector.shape_cast %105 : vector<1x16x128xf32> to vector<16x128xf32>
      %107 = vector.shape_cast %99 : vector<16x128xf32> to vector<1x16x128xf32>
      tpu.vector_store %arg13[%c1_69, %c0_70, %c0_71], %107 {strides = array<i32>} : memref<2x16x128xf32, #tpu.memory_space<vmem>>, vector<1x16x128xf32>,
      %108 = arith.truncf %101 : vector<16x128xf32> to vector<16x128xbf16>
      %c0_72 = arith.constant 0 : index
      %c0_73 = arith.constant 0 : index
      %109 = vector.load %arg7[%c0_72, %c0_73] : memref<128x256xbf16, #tpu.memory_space<vmem>>, vector<128x256xbf16>
      %cst_74 = arith.constant dense<0.000000e+00> : vector<16x256xf32>
      %110 = tpu.matmul %108, %109, %cst_74 {dimension_numbers = #tpu.dot_dimension_numbers<[1], [0], [0], [1], [0, 0, 1, 1], [], []>} : vector<16x128xbf16>, vector<128x256xbf16>, vector<16x256xf32> -> vector<16x256xf32>
      %c0_75 = arith.constant 0 : index
      %c0_76 = arith.constant 0 : index
      %111 = vector.load %arg8[%c0_75, %c0_76] : memref<1x256xf32, #tpu.memory_space<vmem>>, vector<1x256xf32>
      %112 = vector.broadcast %111 : vector<1x256xf32> to vector<16x256xf32>
      %113 = arith.addf %110, %112 : vector<16x256xf32>
      %114 = vector.extract_strided_slice %113 {offsets = [0, 0], sizes = [16, 128], strides = [1, 1]} : vector<16x256xf32> to vector<16x128xf32>
      %115 = vector.extract_strided_slice %113 {offsets = [0, 128], sizes = [16, 128], strides = [1, 1]} : vector<16x256xf32> to vector<16x128xf32>
      %116 = arith.index_cast %arg15 : i32 to index
      %c0_77 = arith.constant 0 : index
      %c0_78 = arith.constant 0 : index
      %117 = vector.load %arg2[%116, %c0_77, %c0_78] : memref<4x16x128xf32, #tpu.memory_space<vmem>>, vector<1x16x128xf32>
      %118 = vector.shape_cast %117 : vector<1x16x128xf32> to vector<16x128xf32>
      %cst_79 = arith.constant 5.000000e-01 : f32
      %119 = vector.broadcast %cst_79 : f32 to vector<16x128xf32>
      %120 = arith.mulf %119, %115 : vector<16x128xf32>
      %121 = math.exp %120 : vector<16x128xf32>
      %122 = arith.mulf %118, %121 : vector<16x128xf32>
      %123 = arith.addf %122, %114 : vector<16x128xf32>
      %124 = tpu.concatenate %123, %113 in 1 : vector<16x128xf32>, vector<16x256xf32> -> vector<16x384xf32>
      %125 = arith.index_cast %arg15 : i32 to index
      %c0_80 = arith.constant 0 : index
      %c0_81 = arith.constant 0 : index
      %126 = vector.load %arg11[%125, %c0_80, %c0_81] : memref<4x16x384xf32, #tpu.memory_space<vmem>>, vector<1x16x384xf32>
      %127 = vector.shape_cast %126 : vector<1x16x384xf32> to vector<16x384xf32>
      %128 = vector.shape_cast %124 : vector<16x384xf32> to vector<1x16x384xf32>
      tpu.vector_store %arg11[%125, %c0_80, %c0_81], %128 {strides = array<i32>} : memref<4x16x384xf32, #tpu.memory_space<vmem>>, vector<1x16x384xf32>,
    }
    %c4_i32_11 = arith.constant 4 : i32
    return
  }
  func.func @transform_0(%arg0: i32) -> (i32, i32, i32) {
    %c0_i32 = arith.constant 0 : i32
    %c0_i32_0 = arith.constant 0 : i32
    %c0_i32_1 = arith.constant 0 : i32
    %c0_i32_2 = arith.constant 0 : i32
    return %c0_i32, %c0_i32_0, %c0_i32_1 : i32, i32, i32
  }
  func.func @transform_1(%arg0: i32) -> (i32, i32, i32) {
    %c0_i32 = arith.constant 0 : i32
    %c0_i32_0 = arith.constant 0 : i32
    %c0_i32_1 = arith.constant 0 : i32
    %c0_i32_2 = arith.constant 0 : i32
    return %c0_i32, %c0_i32_0, %c0_i32_1 : i32, i32, i32
  }
  func.func @transform_2(%arg0: i32) -> (i32, i32) {
    %c0_i32 = arith.constant 0 : i32
    %c0_i32_0 = arith.constant 0 : i32
    %c0_i32_1 = arith.constant 0 : i32
    return %c0_i32, %c0_i32_0 : i32, i32
  }
  func.func @transform_3(%arg0: i32) -> (i32, i32) {
    %c0_i32 = arith.constant 0 : i32
    %c0_i32_0 = arith.constant 0 : i32
    %c0_i32_1 = arith.constant 0 : i32
    return %c0_i32, %c0_i32_0 : i32, i32
  }
  func.func @transform_4(%arg0: i32) -> (i32, i32, i32) {
    %c0_i32 = arith.constant 0 : i32
    %c0_i32_0 = arith.constant 0 : i32
    %c0_i32_1 = arith.constant 0 : i32
    %c0_i32_2 = arith.constant 0 : i32
    return %c0_i32, %c0_i32_0, %c0_i32_1 : i32, i32, i32
  }
  func.func @transform_5(%arg0: i32) -> (i32, i32, i32) {
    %c0_i32 = arith.constant 0 : i32
    %c0_i32_0 = arith.constant 0 : i32
    %c0_i32_1 = arith.constant 0 : i32
    %c0_i32_2 = arith.constant 0 : i32
    return %c0_i32, %c0_i32_0, %c0_i32_1 : i32, i32, i32
  }
  func.func @transform_6(%arg0: i32) -> (i32, i32) {
    %c0_i32 = arith.constant 0 : i32
    %c0_i32_0 = arith.constant 0 : i32
    %c0_i32_1 = arith.constant 0 : i32
    return %c0_i32, %c0_i32_0 : i32, i32
  }
  func.func @transform_7(%arg0: i32) -> (i32, i32) {
    %c0_i32 = arith.constant 0 : i32
    %c0_i32_0 = arith.constant 0 : i32
    %c0_i32_1 = arith.constant 0 : i32
    return %c0_i32, %c0_i32_0 : i32, i32
  }
  func.func @transform_8(%arg0: i32) -> (i32, i32, i32) {
    %c0_i32 = arith.constant 0 : i32
    %c0_i32_0 = arith.constant 0 : i32
    %c0_i32_1 = arith.constant 0 : i32
    %c0_i32_2 = arith.constant 0 : i32
    return %c0_i32, %c0_i32_0, %c0_i32_1 : i32, i32, i32
  }
  func.func @transform_9(%arg0: i32) -> (i32, i32, i32) {
    %c0_i32 = arith.constant 0 : i32
    %c0_i32_0 = arith.constant 0 : i32
    %c0_i32_1 = arith.constant 0 : i32
    %c0_i32_2 = arith.constant 0 : i32
    return %c0_i32, %c0_i32_0, %c0_i32_1 : i32, i32, i32
  }
  func.func @transform_10(%arg0: i32) -> (i32, i32, i32) {
    %c0_i32 = arith.constant 0 : i32
    %c0_i32_0 = arith.constant 0 : i32
    %c0_i32_1 = arith.constant 0 : i32
    %c0_i32_2 = arith.constant 0 : i32
    return %c0_i32, %c0_i32_0, %c0_i32_1 : i32, i32, i32
  }
  func.func @transform_11(%arg0: i32) -> (i32, i32, i32) {
    %c0_i32 = arith.constant 0 : i32
    %c0_i32_0 = arith.constant 0 : i32
    %c0_i32_1 = arith.constant 0 : i32
    %c0_i32_2 = arith.constant 0 : i32
    return %c0_i32, %c0_i32_0, %c0_i32_1 : i32, i32, i32
  }
  func.func @transform_12(%arg0: i32) -> (i32, i32, i32) {
    %c0_i32 = arith.constant 0 : i32
    %c0_i32_0 = arith.constant 0 : i32
    %c0_i32_1 = arith.constant 0 : i32
    %c0_i32_2 = arith.constant 0 : i32
    return %c0_i32, %c0_i32_0, %c0_i32_1 : i32, i32, i32
  }
}

</mosaic_0001>

<llo_original>
// kernel: tpu_custom_call.1
$region0: #{tpu_custom_call.1}
  #allocation0 [shape = 'u32[]', space=smem, size = 0x4, offset = 0x4, fixed_abs, tag = 'smem constant byte address 0x4 - core index']
  #allocation1 [shape = 'u32[144,128]{1,0:T(1,128)}', space=vmem, size = 0x12000, scoped, tag = 'internal scratch']
  #allocation2 [shape = 'bf16[16,256]{1,0:T(16,128)(2,1)}', space=vmem, size = 0x2000, scoped, tag = 'scratch operand']
  %s0 = inlined_call_operand.hbm [shape: f32[4,16,32], index: 0, kind: input, shape index: {}]
  %s1 = inlined_call_operand.hbm [shape: f32[4,16,128], index: 1, kind: input, shape index: {}]
  %s2 = inlined_call_operand.vmem [shape: bf16[32,128], index: 2, kind: input, shape index: {}]
  %s3 = inlined_call_operand.vmem [shape: f32[1,128], index: 3, kind: input, shape index: {}]
  %s4 = inlined_call_operand.hbm [shape: bf16[2,256,512], index: 4, kind: input, shape index: {}]
  %s5 = inlined_call_operand.hbm [shape: f32[2,1,512], index: 5, kind: input, shape index: {}]
  %s6 = inlined_call_operand.vmem [shape: bf16[128,256], index: 6, kind: input, shape index: {}]
  %s7 = inlined_call_operand.vmem [shape: f32[1,256], index: 7, kind: input, shape index: {}]
  %s8 = inlined_call_operand.hbm [shape: f32[2,16,128], index: 8, kind: input, shape index: {}, may-alias: {8,11}]
  %s9 = inlined_call_operand.hbm [shape: f32[2,16,128], index: 9, kind: input, shape index: {}, may-alias: {9,12}]
  %s10 = inlined_call_operand.hbm [shape: f32[4,16,384], index: 10, kind: output, shape index: {0}]
  %s11 = inlined_call_operand.hbm [shape: f32[2,16,128], index: 11, kind: output, shape index: {1}, may-alias: {8,11}]
  %s12 = inlined_call_operand.hbm [shape: f32[2,16,128], index: 12, kind: output, shape index: {2}, may-alias: {9,12}]
  %13 = xla_tuple %s10, %s11, %s12
  %s14 = sld [smem:[#allocation0]]
  $region97: #{tpu_custom_call.1} parent=0
    _
  %s16 = ssub.s32 1, %s14
  %s17 = scalar_select 0, %s16, %s14
  $region1: #{tpu_custom_call.1} parent=0
    #allocation3 [shape = 'u8[32768]{0}', space=vmem, size = 0x8000, scoped, tag = 'input window, operand 0, single buffered']
    #allocation4 [shape = 's32[1]{0}', space=sflag, size = 0x4, scoped, tag = 'scoped memory for tpu_custom_call.1']
    #allocation5 [shape = 's32[1]{0}', space=sflag, size = 0x4, scoped, tag = 'scoped memory for tpu_custom_call.1']
    #allocation6 [shape = 'u8[32768]{0}', space=vmem, size = 0x8000, scoped, tag = 'input window, operand 1, single buffered']
    #allocation7 [shape = 's32[1]{0}', space=sflag, size = 0x4, scoped, tag = 'scoped memory for tpu_custom_call.1']
    #allocation8 [shape = 'u8[524288]{0}', space=vmem, size = 0x80000, scoped, tag = 'input window, operand 4, single buffered']
    #allocation9 [shape = 'u8[4096]{0}', space=vmem, size = 0x1000, scoped, tag = 'input window, operand 5, single buffered']
    #allocation10 [shape = 's32[1]{0}', space=sflag, size = 0x4, scoped, tag = 'scoped memory for tpu_custom_call.1']
    #allocation11 [shape = 'u8[16384]{0}', space=vmem, size = 0x4000, scoped, tag = 'input window, operand 8, single buffered']
    #allocation12 [shape = 'u8[16384]{0}', space=vmem, size = 0x4000, scoped, tag = 'input window, operand 9, single buffered']
    #allocation13 [shape = 's32[1]{0}', space=sflag, size = 0x4, scoped, tag = 'scoped memory for tpu_custom_call.1']
    #allocation14 [shape = 'u8[98304]{0}', space=vmem, size = 0x18000, scoped, tag = 'output window, operand 0, single buffered']
    #allocation15 [shape = 'u8[16384]{0}', space=vmem, size = 0x4000, scoped, tag = 'output window, operand 1, single buffered']
    #allocation16 [shape = 's32[1]{0}', space=sflag, size = 0x4, scoped, tag = 'scoped memory for tpu_custom_call.1']
    #allocation17 [shape = 'u8[16384]{0}', space=vmem, size = 0x4000, scoped, tag = 'output window, operand 2, single buffered']
    %18 = vsyncpa [#allocation4], 0
    %19 = vsyncpa [#allocation7], 0
    %20 = vsyncpa [#allocation10], 0
    %21 = vsyncpa [#allocation13], 0
    %22 = vsyncpa [#allocation5], 0
    %23 = vsyncpa [#allocation16], 0
    // Predicated region
    $region2: #{tpu_custom_call.1} parent=1 // pred_check
      _
    $region3: #{tpu_custom_call.1} parent=1 // pred_check_branch
      %25 = sbr.rel (0) target = $region5
    $region4: #{tpu_custom_call.1} parent=1 // pred_region
      %s27 = ssub.s32 1024, 1024
      %28 = vsyncadd [#allocation4], %s27
      %s29 = sshll.u32 [#allocation3], 4
      %s30 = int_to_ptr.vmem [resolvable:$true] %s29
      %35 = dma.hbm_to_vmem [thread:$0]  %s0, 1024, %s30, [#allocation4], 128, 128, 8
    $region5: #{tpu_custom_call.1} parent=1 // pred_fallthru
      _
    // Predicated region
    $region6: #{tpu_custom_call.1} parent=1 // pred_check
      _
    $region7: #{tpu_custom_call.1} parent=1 // pred_check_branch
      %37 = sbr.rel (0) target = $region9
    $region8: #{tpu_custom_call.1} parent=1 // pred_region
      %s39 = ssub.s32 1024, 1024
      %40 = vsyncadd [#allocation7], %s39
      %s41 = sshll.u32 [#allocation6], 4
      %s42 = int_to_ptr.vmem [resolvable:$true] %s41
      %47 = dma.hbm_to_vmem [thread:$0]  %s1, 1024, %s42, [#allocation7], 128, 128, 8
    $region9: #{tpu_custom_call.1} parent=1 // pred_fallthru
      _
    // Predicated region
    $region10: #{tpu_custom_call.1} parent=1 // pred_check
      _
    $region11: #{tpu_custom_call.1} parent=1 // pred_check_branch
      %49 = sbr.rel (0) target = $region13
    $region12: #{tpu_custom_call.1} parent=1 // pred_region
      _
    $region13: #{tpu_custom_call.1} parent=1 // pred_fallthru
      _
    // Predicated region
    $region14: #{tpu_custom_call.1} parent=1 // pred_check
      _
    $region15: #{tpu_custom_call.1} parent=1 // pred_check_branch
      %51 = sbr.rel (0) target = $region17
    $region16: #{tpu_custom_call.1} parent=1 // pred_region
      _
    $region17: #{tpu_custom_call.1} parent=1 // pred_fallthru
      _
    // Predicated region
    $region18: #{tpu_custom_call.1} parent=1 // pred_check
      _
    $region19: #{tpu_custom_call.1} parent=1 // pred_check_branch
      %53 = sbr.rel (0) target = $region21
    $region20: #{tpu_custom_call.1} parent=1 // pred_region
      %s55 = ssub.s32 16384, 16384
      %56 = vsyncadd [#allocation7], %s55
      %s57 = sshll.u32 [#allocation8], 4
      %s58 = int_to_ptr.vmem [resolvable:$true] %s57
      %63 = dma.hbm_to_vmem [thread:$0]  %s4, 16384, %s58, [#allocation7], 256, 256, 16
    $region21: #{tpu_custom_call.1} parent=1 // pred_fallthru
      _
    // Predicated region
    $region22: #{tpu_custom_call.1} parent=1 // pred_check
      _
    $region23: #{tpu_custom_call.1} parent=1 // pred_check_branch
      %65 = sbr.rel (0) target = $region25
    $region24: #{tpu_custom_call.1} parent=1 // pred_region
      %s67 = ssub.s32 128, 128
      %68 = vsyncadd [#allocation10], %s67
      %s69 = sshll.u32 [#allocation9], 4
      %s70 = int_to_ptr.vmem [resolvable:$true] %s69
      %75 = dma.hbm_to_vmem [thread:$0]  %s5, 128, %s70, [#allocation10], 64, 64, 4
    $region25: #{tpu_custom_call.1} parent=1 // pred_fallthru
      _
    // Predicated region
    $region26: #{tpu_custom_call.1} parent=1 // pred_check
      _
    $region27: #{tpu_custom_call.1} parent=1 // pred_check_branch
      %77 = sbr.rel (0) target = $region29
    $region28: #{tpu_custom_call.1} parent=1 // pred_region
      _
    $region29: #{tpu_custom_call.1} parent=1 // pred_fallthru
      _
    // Predicated region
    $region30: #{tpu_custom_call.1} parent=1 // pred_check
      _
    $region31: #{tpu_custom_call.1} parent=1 // pred_check_branch
      %79 = sbr.rel (0) target = $region33
    $region32: #{tpu_custom_call.1} parent=1 // pred_region
      _
    $region33: #{tpu_custom_call.1} parent=1 // pred_fallthru
      _
    // Predicated region
    $region34: #{tpu_custom_call.1} parent=1 // pred_check
      _
    $region35: #{tpu_custom_call.1} parent=1 // pred_check_branch
      %81 = sbr.rel (0) target = $region37
    $region36: #{tpu_custom_call.1} parent=1 // pred_region
      %s83 = ssub.s32 512, 512
      %84 = vsyncadd [#allocation10], %s83
      %s85 = sshll.u32 [#allocation11], 4
      %s86 = int_to_ptr.vmem [resolvable:$true] %s85
      %91 = dma.hbm_to_vmem [thread:$0]  %s8, 512, %s86, [#allocation10], 128, 128, 8
    $region37: #{tpu_custom_call.1} parent=1 // pred_fallthru
      _
    // Predicated region
    $region38: #{tpu_custom_call.1} parent=1 // pred_check
      _
    $region39: #{tpu_custom_call.1} parent=1 // pred_check_branch
      %93 = sbr.rel (0) target = $region41
    $region40: #{tpu_custom_call.1} parent=1 // pred_region
      %s95 = ssub.s32 512, 512
      %96 = vsyncadd [#allocation13], %s95
      %s97 = sshll.u32 [#allocation12], 4
      %s98 = int_to_ptr.vmem [resolvable:$true] %s97
      %103 = dma.hbm_to_vmem [thread:$0]  %s9, 512, %s98, [#allocation13], 128, 128, 8
    $region41: #{tpu_custom_call.1} parent=1 // pred_fallthru
      _
    // Predicated region
    $region42: #{tpu_custom_call.1} parent=1 // pred_check
      _
    $region43: #{tpu_custom_call.1} parent=1 // pred_check_branch
      %105 = sbr.rel (0) target = $region45
    $region44: #{tpu_custom_call.1} parent=1 // pred_region
      %106 = dma.done [#allocation4], 1024
    $region45: #{tpu_custom_call.1} parent=1 // pred_fallthru
      _
    // Predicated region
    $region46: #{tpu_custom_call.1} parent=1 // pred_check
      _
    $region47: #{tpu_custom_call.1} parent=1 // pred_check_branch
      %108 = sbr.rel (0) target = $region49
    $region48: #{tpu_custom_call.1} parent=1 // pred_region
      %109 = dma.done [#allocation7], 1024
    $region49: #{tpu_custom_call.1} parent=1 // pred_fallthru
      _
    // Predicated region
    $region50: #{tpu_custom_call.1} parent=1 // pred_check
      _
    $region51: #{tpu_custom_call.1} parent=1 // pred_check_branch
      %111 = sbr.rel (0) target = $region53
    $region52: #{tpu_custom_call.1} parent=1 // pred_region
      %112 = dma.done [#allocation7], 16384
    $region53: #{tpu_custom_call.1} parent=1 // pred_fallthru
      _
    // Predicated region
    $region54: #{tpu_custom_call.1} parent=1 // pred_check
      _
    $region55: #{tpu_custom_call.1} parent=1 // pred_check_branch
      %114 = sbr.rel (0) target = $region57
    $region56: #{tpu_custom_call.1} parent=1 // pred_region
      %115 = dma.done [#allocation10], 128
    $region57: #{tpu_custom_call.1} parent=1 // pred_fallthru
      _
    // Predicated region
    $region58: #{tpu_custom_call.1} parent=1 // pred_check
      _
    $region59: #{tpu_custom_call.1} parent=1 // pred_check_branch
      %117 = sbr.rel (0) target = $region61
    $region60: #{tpu_custom_call.1} parent=1 // pred_region
      %118 = dma.done [#allocation10], 512
    $region61: #{tpu_custom_call.1} parent=1 // pred_fallthru
      _
    // Predicated region
    $region62: #{tpu_custom_call.1} parent=1 // pred_check
      _
    $region63: #{tpu_custom_call.1} parent=1 // pred_check_branch
      %120 = sbr.rel (0) target = $region65
    $region64: #{tpu_custom_call.1} parent=1 // pred_region
      %121 = dma.done [#allocation13], 512
    $region65: #{tpu_custom_call.1} parent=1 // pred_fallthru
      _
    %v123 = vld [vmem:[#allocation11] sm:$0xff]
    %v124 = vld [vmem:[#allocation11 + $0x8] sm:$0xff]
    %v125 = vld [vmem:[#allocation11 + $0x10] sm:$0xff]
    %v126 = vld [vmem:[#allocation11 + $0x18] sm:$0xff]
    %127 = vst [vmem:[#allocation15] sm:$0xff] %v123
    %128 = vst [vmem:[#allocation15 + $0x8] sm:$0xff] %v124
    %129 = vst [vmem:[#allocation15 + $0x10] sm:$0xff] %v125
    %130 = vst [vmem:[#allocation15 + $0x18] sm:$0xff] %v126
    %v131 = vld [vmem:[#allocation12] sm:$0xff]
    %v132 = vld [vmem:[#allocation12 + $0x8] sm:$0xff]
    %v133 = vld [vmem:[#allocation12 + $0x10] sm:$0xff]
    %v134 = vld [vmem:[#allocation12 + $0x18] sm:$0xff]
    %135 = vst [vmem:[#allocation17] sm:$0xff] %v131
    %136 = vst [vmem:[#allocation17 + $0x8] sm:$0xff] %v132
    %137 = vst [vmem:[#allocation17 + $0x10] sm:$0xff] %v133
    %138 = vst [vmem:[#allocation17 + $0x18] sm:$0xff] %v134
    loop: start=0, step=1, limit=4
    $region66: #{tpu_custom_call.1} parent=1 // loop_pre_header
      _
    $region67: #{tpu_custom_call.1} parent=1 // loop_header
      %s140 = sphi 0, %s144
      %p141 = scmp.ge.s32.totalorder %s140, 4
    $region68: #{tpu_custom_call.1} parent=1 // loop_header_branch
      %143 = sbr.rel (%p141) target = $region72
    $region69: #{tpu_custom_call.1} parent=1 // loop_body
      %s145 = smul.u32 %s140, 16
      %s146 = scalar_lea.vmem [#allocation3], %s145
      %v147 = vld [vmem:[%s146] sm:$0xff]
      %v148 = vld [vmem:[%s146 + $0x8] sm:$0xff]
      %v149 = vpack.c.bf16 %v148, %v147
      %v150 = vld [vmem:[%s2] sm:$0xf]
      %v151 = vld [vmem:[%s2 + $0x4] sm:$0xf]
      %v152 = vld [vmem:[%s2 + $0x8] sm:$0xf]
      %v153 = vld [vmem:[%s2 + $0xc] sm:$0xf]
      %v154 = vld [vmem:[%s3] sm:$0x1]
      %v156 = vlaneseq
      %v157 = vshrl.u32 %v156, 7
      %v158 = vsub.s32 0, %v157
      %v159 = vrot.slane %v154, %v158
      %v165 = vunpack.c.l.b16 %v150
      %v166 = vunpack.c.l.b16 %v151
      %v167 = vunpack.c.l.b16 %v152
      %v168 = vunpack.c.l.b16 %v153
      %v169 = vpack.c.b16 %v166, %v165
      %v170 = vpack.c.b16 %v168, %v167
      %vm173 = vcmask 261120
      %v175 = vsel %vm173, %v149, 0
      %177 = vmatprep.subr.bf16.mxu0 0
      %178 = vmatpush1.bf16.msra.mxu0 %v169
      %179 = vmatprep.subr.bf16.mxu0 0
      %180 = vmatpush1.bf16.msra.mxu0 %v170
      %181 = vmatprep.subr.bf16.mxu0 0
      %182 = vmatpush1.bf16.msra.mxu0 0
      %183 = vmatprep.subr.bf16.mxu0 0
      %184 = vmatpush1.bf16.msra.mxu0 0
      %185 = vmatprep.subr.bf16.mxu0 0
      %186 = vmatpush1.bf16.msra.mxu0 0
      %187 = vmatprep.subr.bf16.mxu0 0
      %188 = vmatpush1.bf16.msra.mxu0 0
      %189 = vmatprep.subr.bf16.mxu0 0
      %190 = vmatpush1.bf16.msra.mxu0 0
      %191 = vmatprep.subr.bf16.mxu0 0
      %192 = vmatpush1.bf16.msra.mxu0 0
      %193 = vmatprep.subr.bf16.mxu0 0
      %194 = vmatpush1.bf16.msra.mxu0 0
      %195 = vmatprep.subr.bf16.mxu0 0
      %196 = vmatpush1.bf16.msra.mxu0 0
      %197 = vmatprep.subr.bf16.mxu0 0
      %198 = vmatpush1.bf16.msra.mxu0 0
      %199 = vmatprep.subr.bf16.mxu0 0
      %200 = vmatpush1.bf16.msra.mxu0 0
      %201 = vmatprep.subr.bf16.mxu0 0
      %202 = vmatpush1.bf16.msra.mxu0 0
      %203 = vmatprep.subr.bf16.mxu0 0
      %204 = vmatpush1.bf16.msra.mxu0 0
      %205 = vmatprep.subr.bf16.mxu0 0
      %206 = vmatpush1.bf16.msra.mxu0 0
      %207 = vmatprep.subr.bf16.mxu0 0
      %208 = vmatpush1.bf16.msra.mxu0 0
      %209 = vmatprep.mubr.bf16.mxu0 0
      %210 = vmatmul.mubr.bf16.gmra.mrb[0].mxu0 %v175
      %v211 = vpop.f32.mrb[0].mxu0
      %v212 = vadd.f32 %v159, %v211
      %v213 = vpop.f32.mrb[0].mxu0
      %v214 = vpop.f32.mrb[0].mxu0
      %v215 = vadd.f32 %v159, %v214
      %v216 = vpop.f32.mrb[0].mxu0
      %217 = vdwg.mxu0
      %v218 = vld [vmem:[#allocation15] sm:$0xff]
      %v219 = vld [vmem:[#allocation15 + $0x8] sm:$0xff]
      %v220 = vld [vmem:[#allocation17] sm:$0xff]
      %v221 = vld [vmem:[#allocation17 + $0x8] sm:$0xff]
      %v222 = vpack.c.bf16 %v215, %v212
      %223 = vst [vmem:[#allocation2] sm:$0xff] %v222
      %v224 = vpack.c.bf16 %v219, %v218
      %225 = vst [vmem:[#allocation2 + $0x8] sm:$0xff] %v224
      %v226 = vld [vmem:[#allocation2] sm:$0xff]
      %v227 = vld [vmem:[#allocation2 + $0x8] sm:$0xff]
      %v228 = vld [vmem:[#allocation8] sm:$0xff]
      %v229 = vld [vmem:[#allocation8 + $0x8] sm:$0xff]
      %v230 = vld [vmem:[#allocation8 + $0x10] sm:$0xff]
      %v231 = vld [vmem:[#allocation8 + $0x18] sm:$0xff]
      %v232 = vld [vmem:[#allocation8 + $0x20] sm:$0xff]
      %v233 = vld [vmem:[#allocation8 + $0x28] sm:$0xff]
      %v234 = vld [vmem:[#allocation8 + $0x30] sm:$0xff]
      %v235 = vld [vmem:[#allocation8 + $0x38] sm:$0xff]
      %v236 = vld [vmem:[#allocation8 + $0x40] sm:$0xff]
      %v237 = vld [vmem:[#allocation8 + $0x48] sm:$0xff]
      %v238 = vld [vmem:[#allocation8 + $0x50] sm:$0xff]
      %v239 = vld [vmem:[#allocation8 + $0x58] sm:$0xff]
      %v240 = vld [vmem:[#allocation8 + $0x60] sm:$0xff]
      %v241 = vld [vmem:[#allocation8 + $0x68] sm:$0xff]
      %v242 = vld [vmem:[#allocation8 + $0x70] sm:$0xff]
      %v243 = vld [vmem:[#allocation8 + $0x78] sm:$0xff]
      %v244 = vld [vmem:[#allocation8 + $0x80] sm:$0xff]
      %v245 = vld [vmem:[#allocation8 + $0x88] sm:$0xff]
      %v246 = vld [vmem:[#allocation8 + $0x90] sm:$0xff]
      %v247 = vld [vmem:[#allocation8 + $0x98] sm:$0xff]
      %v248 = vld [vmem:[#allocation8 + $0xa0] sm:$0xff]
      %v249 = vld [vmem:[#allocation8 + $0xa8] sm:$0xff]
      %v250 = vld [vmem:[#allocation8 + $0xb0] sm:$0xff]
      %v251 = vld [vmem:[#allocation8 + $0xb8] sm:$0xff]
      %v252 = vld [vmem:[#allocation8 + $0xc0] sm:$0xff]
      %v253 = vld [vmem:[#allocation8 + $0xc8] sm:$0xff]
      %v254 = vld [vmem:[#allocation8 + $0xd0] sm:$0xff]
      %v255 = vld [vmem:[#allocation8 + $0xd8] sm:$0xff]
      %v256 = vld [vmem:[#allocation8 + $0xe0] sm:$0xff]
      %v257 = vld [vmem:[#allocation8 + $0xe8] sm:$0xff]
      %v258 = vld [vmem:[#allocation8 + $0xf0] sm:$0xff]
      %v259 = vld [vmem:[#allocation8 + $0xf8] sm:$0xff]
      %v260 = vld [vmem:[#allocation8 + $0x100] sm:$0xff]
      %v261 = vld [vmem:[#allocation8 + $0x108] sm:$0xff]
      %v262 = vld [vmem:[#allocation8 + $0x110] sm:$0xff]
      %v263 = vld [vmem:[#allocation8 + $0x118] sm:$0xff]
      %v264 = vld [vmem:[#allocation8 + $0x120] sm:$0xff]
      %v265 = vld [vmem:[#allocation8 + $0x128] sm:$0xff]
      %v266 = vld [vmem:[#allocation8 + $0x130] sm:$0xff]
      %v267 = vld [vmem:[#allocation8 + $0x138] sm:$0xff]
      %v268 = vld [vmem:[#allocation8 + $0x140] sm:$0xff]
      %v269 = vld [vmem:[#allocation8 + $0x148] sm:$0xff]
      %v270 = vld [vmem:[#allocation8 + $0x150] sm:$0xff]
      %v271 = vld [vmem:[#allocation8 + $0x158] sm:$0xff]
      %v272 = vld [vmem:[#allocation8 + $0x160] sm:$0xff]
      %v273 = vld [vmem:[#allocation8 + $0x168] sm:$0xff]
      %v274 = vld [vmem:[#allocation8 + $0x170] sm:$0xff]
      %v275 = vld [vmem:[#allocation8 + $0x178] sm:$0xff]
      %v276 = vld [vmem:[#allocation8 + $0x180] sm:$0xff]
      %v277 = vld [vmem:[#allocation8 + $0x188] sm:$0xff]
      %v278 = vld [vmem:[#allocation8 + $0x190] sm:$0xff]
      %v279 = vld [vmem:[#allocation8 + $0x198] sm:$0xff]
      %v280 = vld [vmem:[#allocation8 + $0x1a0] sm:$0xff]
      %v281 = vld [vmem:[#allocation8 + $0x1a8] sm:$0xff]
      %v282 = vld [vmem:[#allocation8 + $0x1b0] sm:$0xff]
      %v283 = vld [vmem:[#allocation8 + $0x1b8] sm:$0xff]
      %v284 = vld [vmem:[#allocation8 + $0x1c0] sm:$0xff]
      %v285 = vld [vmem:[#allocation8 + $0x1c8] sm:$0xff]
      %v286 = vld [vmem:[#allocation8 + $0x1d0] sm:$0xff]
      %v287 = vld [vmem:[#allocation8 + $0x1d8] sm:$0xff]
      %v288 = vld [vmem:[#allocation8 + $0x1e0] sm:$0xff]
      %v289 = vld [vmem:[#allocation8 + $0x1e8] sm:$0xff]
      %v290 = vld [vmem:[#allocation8 + $0x1f0] sm:$0xff]
      %v291 = vld [vmem:[#allocation8 + $0x1f8] sm:$0xff]
      %v292 = vld [vmem:[#allocation9] sm:$0xf]
      %v294 = vlaneseq
      %v295 = vshrl.u32 %v294, 7
      %v296 = vsub.s32 0, %v295
      %v297 = vrot.slane %v292, %v296
      %v298 = vlaneseq
      %v299 = vshrl.u32 %v298, 7
      %v300 = vsub.s32 1, %v299
      %v301 = vrot.slane %v292, %v300
      %v302 = vlaneseq
      %v303 = vshrl.u32 %v302, 7
      %v304 = vsub.s32 2, %v303
      %v305 = vrot.slane %v292, %v304
      %v306 = vlaneseq
      %v307 = vshrl.u32 %v306, 7
      %v308 = vsub.s32 3, %v307
      %v309 = vrot.slane %v292, %v308
      %v378 = vunpack.c.l.b16 %v228
      %v379 = vunpack.c.h.b16 %v228
      %v380 = vunpack.c.l.b16 %v229
      %v381 = vunpack.c.h.b16 %v229
      %v382 = vunpack.c.l.b16 %v230
      %v383 = vunpack.c.h.b16 %v230
      %v384 = vunpack.c.l.b16 %v231
      %v385 = vunpack.c.h.b16 %v231
      %v386 = vunpack.c.l.b16 %v232
      %v387 = vunpack.c.h.b16 %v232
      %v388 = vunpack.c.l.b16 %v233
      %v389 = vunpack.c.h.b16 %v233
      %v390 = vunpack.c.l.b16 %v234
      %v391 = vunpack.c.h.b16 %v234
      %v392 = vunpack.c.l.b16 %v235
      %v393 = vunpack.c.h.b16 %v235
      %v394 = vunpack.c.l.b16 %v236
      %v395 = vunpack.c.h.b16 %v236
      %v396 = vunpack.c.l.b16 %v237
      %v397 = vunpack.c.h.b16 %v237
      %v398 = vunpack.c.l.b16 %v238
      %v399 = vunpack.c.h.b16 %v238
      %v400 = vunpack.c.l.b16 %v239
      %v401 = vunpack.c.h.b16 %v239
      %v402 = vunpack.c.l.b16 %v240
      %v403 = vunpack.c.h.b16 %v240
      %v404 = vunpack.c.l.b16 %v241
      %v405 = vunpack.c.h.b16 %v241
      %v406 = vunpack.c.l.b16 %v242
      %v407 = vunpack.c.h.b16 %v242
      %v408 = vunpack.c.l.b16 %v243
      %v409 = vunpack.c.h.b16 %v243
      %v410 = vunpack.c.l.b16 %v244
      %v411 = vunpack.c.h.b16 %v244
      %v412 = vunpack.c.l.b16 %v245
      %v413 = vunpack.c.h.b16 %v245
      %v414 = vunpack.c.l.b16 %v246
      %v415 = vunpack.c.h.b16 %v246
      %v416 = vunpack.c.l.b16 %v247
      %v417 = vunpack.c.h.b16 %v247
      %v418 = vunpack.c.l.b16 %v248
      %v419 = vunpack.c.h.b16 %v248
      %v420 = vunpack.c.l.b16 %v249
      %v421 = vunpack.c.h.b16 %v249
      %v422 = vunpack.c.l.b16 %v250
      %v423 = vunpack.c.h.b16 %v250
      %v424 = vunpack.c.l.b16 %v251
      %v425 = vunpack.c.h.b16 %v251
      %v426 = vunpack.c.l.b16 %v252
      %v427 = vunpack.c.h.b16 %v252
      %v428 = vunpack.c.l.b16 %v253
      %v429 = vunpack.c.h.b16 %v253
      %v430 = vunpack.c.l.b16 %v254
      %v431 = vunpack.c.h.b16 %v254
      %v432 = vunpack.c.l.b16 %v255
      %v433 = vunpack.c.h.b16 %v255
      %v434 = vunpack.c.l.b16 %v256
      %v435 = vunpack.c.h.b16 %v256
      %v436 = vunpack.c.l.b16 %v257
      %v437 = vunpack.c.h.b16 %v257
      %v438 = vunpack.c.l.b16 %v258
      %v439 = vunpack.c.h.b16 %v258
      %v440 = vunpack.c.l.b16 %v259
      %v441 = vunpack.c.h.b16 %v259
      %v442 = vunpack.c.l.b16 %v260
      %v443 = vunpack.c.h.b16 %v260
      %v444 = vunpack.c.l.b16 %v261
      %v445 = vunpack.c.h.b16 %v261
      %v446 = vunpack.c.l.b16 %v262
      %v447 = vunpack.c.h.b16 %v262
      %v448 = vunpack.c.l.b16 %v263
      %v449 = vunpack.c.h.b16 %v263
      %v450 = vunpack.c.l.b16 %v264
      %v451 = vunpack.c.h.b16 %v264
      %v452 = vunpack.c.l.b16 %v265
      %v453 = vunpack.c.h.b16 %v265
      %v454 = vunpack.c.l.b16 %v266
      %v455 = vunpack.c.h.b16 %v266
      %v456 = vunpack.c.l.b16 %v267
      %v457 = vunpack.c.h.b16 %v267
      %v458 = vunpack.c.l.b16 %v268
      %v459 = vunpack.c.h.b16 %v268
      %v460 = vunpack.c.l.b16 %v269
      %v461 = vunpack.c.h.b16 %v269
      %v462 = vunpack.c.l.b16 %v270
      %v463 = vunpack.c.h.b16 %v270
      %v464 = vunpack.c.l.b16 %v271
      %v465 = vunpack.c.h.b16 %v271
      %v466 = vunpack.c.l.b16 %v272
      %v467 = vunpack.c.h.b16 %v272
      %v468 = vunpack.c.l.b16 %v273
      %v469 = vunpack.c.h.b16 %v273
      %v470 = vunpack.c.l.b16 %v274
      %v471 = vunpack.c.h.b16 %v274
      %v472 = vunpack.c.l.b16 %v275
      %v473 = vunpack.c.h.b16 %v275
      %v474 = vunpack.c.l.b16 %v276
      %v475 = vunpack.c.h.b16 %v276
      %v476 = vunpack.c.l.b16 %v277
      %v477 = vunpack.c.h.b16 %v277
      %v478 = vunpack.c.l.b16 %v278
      %v479 = vunpack.c.h.b16 %v278
      %v480 = vunpack.c.l.b16 %v279
      %v481 = vunpack.c.h.b16 %v279
      %v482 = vunpack.c.l.b16 %v280
      %v483 = vunpack.c.h.b16 %v280
      %v484 = vunpack.c.l.b16 %v281
      %v485 = vunpack.c.h.b16 %v281
      %v486 = vunpack.c.l.b16 %v282
      %v487 = vunpack.c.h.b16 %v282
      %v488 = vunpack.c.l.b16 %v283
      %v489 = vunpack.c.h.b16 %v283
      %v490 = vunpack.c.l.b16 %v284
      %v491 = vunpack.c.h.b16 %v284
      %v492 = vunpack.c.l.b16 %v285
      %v493 = vunpack.c.h.b16 %v285
      %v494 = vunpack.c.l.b16 %v286
      %v495 = vunpack.c.h.b16 %v286
      %v496 = vunpack.c.l.b16 %v287
      %v497 = vunpack.c.h.b16 %v287
      %v498 = vunpack.c.l.b16 %v288
      %v499 = vunpack.c.h.b16 %v288
      %v500 = vunpack.c.l.b16 %v289
      %v501 = vunpack.c.h.b16 %v289
      %v502 = vunpack.c.l.b16 %v290
      %v503 = vunpack.c.h.b16 %v290
      %v504 = vunpack.c.l.b16 %v291
      %v505 = vunpack.c.h.b16 %v291
      %v506 = vpack.c.b16 %v382, %v378
      %v507 = vpack.c.b16 %v383, %v379
      %v508 = vpack.c.b16 %v384, %v380
      %v509 = vpack.c.b16 %v385, %v381
      %v510 = vpack.c.b16 %v390, %v386
      %v511 = vpack.c.b16 %v391, %v387
      %v512 = vpack.c.b16 %v392, %v388
      %v513 = vpack.c.b16 %v393, %v389
      %v514 = vpack.c.b16 %v398, %v394
      %v515 = vpack.c.b16 %v399, %v395
      %v516 = vpack.c.b16 %v400, %v396
      %v517 = vpack.c.b16 %v401, %v397
      %v518 = vpack.c.b16 %v406, %v402
      %v519 = vpack.c.b16 %v407, %v403
      %v520 = vpack.c.b16 %v408, %v404
      %v521 = vpack.c.b16 %v409, %v405
      %v522 = vpack.c.b16 %v414, %v410
      %v523 = vpack.c.b16 %v415, %v411
      %v524 = vpack.c.b16 %v416, %v412
      %v525 = vpack.c.b16 %v417, %v413
      %v526 = vpack.c.b16 %v422, %v418
      %v527 = vpack.c.b16 %v423, %v419
      %v528 = vpack.c.b16 %v424, %v420
      %v529 = vpack.c.b16 %v425, %v421
      %v530 = vpack.c.b16 %v430, %v426
      %v531 = vpack.c.b16 %v431, %v427
      %v532 = vpack.c.b16 %v432, %v428
      %v533 = vpack.c.b16 %v433, %v429
      %v534 = vpack.c.b16 %v438, %v434
      %v535 = vpack.c.b16 %v439, %v435
      %v536 = vpack.c.b16 %v440, %v436
      %v537 = vpack.c.b16 %v441, %v437
      %v538 = vpack.c.b16 %v446, %v442
      %v539 = vpack.c.b16 %v447, %v443
      %v540 = vpack.c.b16 %v448, %v444
      %v541 = vpack.c.b16 %v449, %v445
      %v542 = vpack.c.b16 %v454, %v450
      %v543 = vpack.c.b16 %v455, %v451
      %v544 = vpack.c.b16 %v456, %v452
      %v545 = vpack.c.b16 %v457, %v453
      %v546 = vpack.c.b16 %v462, %v458
      %v547 = vpack.c.b16 %v463, %v459
      %v548 = vpack.c.b16 %v464, %v460
      %v549 = vpack.c.b16 %v465, %v461
      %v550 = vpack.c.b16 %v470, %v466
      %v551 = vpack.c.b16 %v471, %v467
      %v552 = vpack.c.b16 %v472, %v468
      %v553 = vpack.c.b16 %v473, %v469
      %v554 = vpack.c.b16 %v478, %v474
      %v555 = vpack.c.b16 %v479, %v475
      %v556 = vpack.c.b16 %v480, %v476
      %v557 = vpack.c.b16 %v481, %v477
      %v558 = vpack.c.b16 %v486, %v482
      %v559 = vpack.c.b16 %v487, %v483
      %v560 = vpack.c.b16 %v488, %v484
      %v561 = vpack.c.b16 %v489, %v485
      %v562 = vpack.c.b16 %v494, %v490
      %v563 = vpack.c.b16 %v495, %v491
      %v564 = vpack.c.b16 %v496, %v492
      %v565 = vpack.c.b16 %v497, %v493
      %v566 = vpack.c.b16 %v502, %v498
      %v567 = vpack.c.b16 %v503, %v499
      %v568 = vpack.c.b16 %v504, %v500
      %v569 = vpack.c.b16 %v505, %v501
      %634 = vmatprep.subr.bf16.mxu0 %v507
      %635 = vmatpush1.bf16.msra.mxu0 %v506
      %636 = vmatprep.subr.bf16.mxu0 %v511
      %637 = vmatpush1.bf16.msra.mxu0 %v510
      %638 = vmatprep.subr.bf16.mxu0 %v515
      %639 = vmatpush1.bf16.msra.mxu0 %v514
      %640 = vmatprep.subr.bf16.mxu0 %v519
      %641 = vmatpush1.bf16.msra.mxu0 %v518
      %642 = vmatprep.subr.bf16.mxu0 %v523
      %643 = vmatpush1.bf16.msra.mxu0 %v522
      %644 = vmatprep.subr.bf16.mxu0 %v527
      %645 = vmatpush1.bf16.msra.mxu0 %v526
      %646 = vmatprep.subr.bf16.mxu0 %v531
      %647 = vmatpush1.bf16.msra.mxu0 %v530
      %648 = vmatprep.subr.bf16.mxu0 %v535
      %649 = vmatpush1.bf16.msra.mxu0 %v534
      %650 = vmatprep.subr.bf16.mxu0 %v539
      %651 = vmatpush1.bf16.msra.mxu0 %v538
      %652 = vmatprep.subr.bf16.mxu0 %v543
      %653 = vmatpush1.bf16.msra.mxu0 %v542
      %654 = vmatprep.subr.bf16.mxu0 %v547
      %655 = vmatpush1.bf16.msra.mxu0 %v546
      %656 = vmatprep.subr.bf16.mxu0 %v551
      %657 = vmatpush1.bf16.msra.mxu0 %v550
      %658 = vmatprep.subr.bf16.mxu0 %v555
      %659 = vmatpush1.bf16.msra.mxu0 %v554
      %660 = vmatprep.subr.bf16.mxu0 %v559
      %661 = vmatpush1.bf16.msra.mxu0 %v558
      %662 = vmatprep.subr.bf16.mxu0 %v563
      %663 = vmatpush1.bf16.msra.mxu0 %v562
      %664 = vmatprep.subr.bf16.mxu0 %v567
      %665 = vmatpush1.bf16.msra.mxu0 %v566
      %666 = vmatprep.mubr.bf16.mxu0 %v227
      %667 = vmatmul.mubr.bf16.gmra.mrb[0].mxu0 %v226
      %v668 = vpop.f32.mrb[0].mxu0
      %v669 = vadd.f32 %v297, %v668
      %v670 = vpop.f32.mrb[0].mxu0
      %v671 = vadd.f32 %v301, %v670
      %v672 = vpop.f32.mrb[0].mxu0
      %v673 = vadd.f32 %v297, %v672
      %v674 = vpop.f32.mrb[0].mxu0
      %v675 = vadd.f32 %v301, %v674
      %676 = vdwg.mxu0
      %677 = vmatprep.subr.bf16.mxu0 %v509
      %678 = vmatpush1.bf16.msra.mxu0 %v508
      %679 = vmatprep.subr.bf16.mxu0 %v513
      %680 = vmatpush1.bf16.msra.mxu0 %v512
      %681 = vmatprep.subr.bf16.mxu0 %v517
      %682 = vmatpush1.bf16.msra.mxu0 %v516
      %683 = vmatprep.subr.bf16.mxu0 %v521
      %684 = vmatpush1.bf16.msra.mxu0 %v520
      %685 = vmatprep.subr.bf16.mxu0 %v525
      %686 = vmatpush1.bf16.msra.mxu0 %v524
      %687 = vmatprep.subr.bf16.mxu0 %v529
      %688 = vmatpush1.bf16.msra.mxu0 %v528
      %689 = vmatprep.subr.bf16.mxu0 %v533
      %690 = vmatpush1.bf16.msra.mxu0 %v532
      %691 = vmatprep.subr.bf16.mxu0 %v537
      %692 = vmatpush1.bf16.msra.mxu0 %v536
      %693 = vmatprep.subr.bf16.mxu0 %v541
      %694 = vmatpush1.bf16.msra.mxu0 %v540
      %695 = vmatprep.subr.bf16.mxu0 %v545
      %696 = vmatpush1.bf16.msra.mxu0 %v544
      %697 = vmatprep.subr.bf16.mxu0 %v549
      %698 = vmatpush1.bf16.msra.mxu0 %v548
      %699 = vmatprep.subr.bf16.mxu0 %v553
      %700 = vmatpush1.bf16.msra.mxu0 %v552
      %701 = vmatprep.subr.bf16.mxu0 %v557
      %702 = vmatpush1.bf16.msra.mxu0 %v556
      %703 = vmatprep.subr.bf16.mxu0 %v561
      %704 = vmatpush1.bf16.msra.mxu0 %v560
      %705 = vmatprep.subr.bf16.mxu0 %v565
      %706 = vmatpush1.bf16.msra.mxu0 %v564
      %707 = vmatprep.subr.bf16.mxu0 %v569
      %708 = vmatpush1.bf16.msra.mxu0 %v568
      %709 = vmatprep.mubr.bf16.mxu0 %v227
      %710 = vmatmul.mubr.bf16.gmra.mrb[0].mxu0 %v226
      %v711 = vpop.f32.mrb[0].mxu0
      %v712 = vadd.f32 %v305, %v711
      %v713 = vpop.f32.mrb[0].mxu0
      %v714 = vadd.f32 %v309, %v713
      %v715 = vpop.f32.mrb[0].mxu0
      %v716 = vadd.f32 %v305, %v715
      %v717 = vpop.f32.mrb[0].mxu0
      %v718 = vadd.f32 %v309, %v717
      %719 = vdwg.mxu0
      %v720 = vxor.u32 %v669, 2147483648
      %v721 = vxor.u32 %v673, 2147483648
      %v722 = vmul.f32 %v720, 1.442695
      %v723 = vpow.pop %v722
      %v724 = vmul.f32 %v721, 1.442695
      %v725 = vpow.pop %v724
      %v726 = vadd.f32 %v723, 1.0
      %v727 = vadd.f32 %v725, 1.0
      %v728 = vrcp.pop %v726
      %v729 = vmul.f32 1.0, %v728
      %v730 = vrcp.pop %v727
      %v731 = vmul.f32 1.0, %v730
      %v732 = vxor.u32 %v671, 2147483648
      %v733 = vxor.u32 %v675, 2147483648
      %v734 = vmul.f32 %v732, 1.442695
      %v735 = vpow.pop %v734
      %v736 = vmul.f32 %v733, 1.442695
      %v737 = vpow.pop %v736
      %v738 = vadd.f32 %v735, 1.0
      %v739 = vadd.f32 %v737, 1.0
      %v740 = vrcp.pop %v738
      %v741 = vmul.f32 1.0, %v740
      %v742 = vrcp.pop %v739
      %v743 = vmul.f32 1.0, %v742
      %v744 = vtanh.pop %v712
      %v745 = vtanh.pop %v716
      %v746 = vxor.u32 %v714, 2147483648
      %v747 = vxor.u32 %v718, 2147483648
      %v748 = vmul.f32 %v746, 1.442695
      %v749 = vpow.pop %v748
      %v750 = vmul.f32 %v747, 1.442695
      %v751 = vpow.pop %v750
      %v752 = vadd.f32 %v749, 1.0
      %v753 = vadd.f32 %v751, 1.0
      %v754 = vrcp.pop %v752
      %v755 = vmul.f32 1.0, %v754
      %v756 = vrcp.pop %v753
      %v757 = vmul.f32 1.0, %v756
      %v758 = vmul.f32 %v741, %v220
      %v759 = vmul.f32 %v743, %v221
      %v760 = vmul.f32 %v729, %v744
      %v761 = vmul.f32 %v731, %v745
      %v762 = vadd.f32 %v758, %v760
      %v763 = vadd.f32 %v759, %v761
      %v764 = vtanh.pop %v762
      %v765 = vtanh.pop %v763
      %v766 = vmul.f32 %v755, %v764
      %v767 = vmul.f32 %v757, %v765
      %768 = vst [vmem:[#allocation15] sm:$0xff] %v766
      %769 = vst [vmem:[#allocation15 + $0x8] sm:$0xff] %v767
      %770 = vst [vmem:[#allocation17] sm:$0xff] %v762
      %771 = vst [vmem:[#allocation17 + $0x8] sm:$0xff] %v763
      %s772 = scalar_lea.vmem [#allocation15], 16
      %v773 = vld [vmem:[%s772] sm:$0xff]
      %v774 = vld [vmem:[%s772 + $0x8] sm:$0xff]
      %s775 = scalar_lea.vmem [#allocation17], 16
      %v776 = vld [vmem:[%s775] sm:$0xff]
      %v777 = vld [vmem:[%s775 + $0x8] sm:$0xff]
      %v778 = vpack.c.bf16 %v767, %v766
      %779 = vst [vmem:[#allocation2] sm:$0xff] %v778
      %v780 = vpack.c.bf16 %v774, %v773
      %781 = vst [vmem:[#allocation2 + $0x8] sm:$0xff] %v780
      %v782 = vld [vmem:[#allocation2] sm:$0xff]
      %v783 = vld [vmem:[#allocation2 + $0x8] sm:$0xff]
      %s784 = scalar_lea.vmem [#allocation8], 512
      %v785 = vld [vmem:[%s784] sm:$0xff]
      %v786 = vld [vmem:[%s784 + $0x8] sm:$0xff]
      %v787 = vld [vmem:[%s784 + $0x10] sm:$0xff]
      %v788 = vld [vmem:[%s784 + $0x18] sm:$0xff]
      %v789 = vld [vmem:[%s784 + $0x20] sm:$0xff]
      %v790 = vld [vmem:[%s784 + $0x28] sm:$0xff]
      %v791 = vld [vmem:[%s784 + $0x30] sm:$0xff]
      %v792 = vld [vmem:[%s784 + $0x38] sm:$0xff]
      %v793 = vld [vmem:[%s784 + $0x40] sm:$0xff]
      %v794 = vld [vmem:[%s784 + $0x48] sm:$0xff]
      %v795 = vld [vmem:[%s784 + $0x50] sm:$0xff]
      %v796 = vld [vmem:[%s784 + $0x58] sm:$0xff]
      %v797 = vld [vmem:[%s784 + $0x60] sm:$0xff]
      %v798 = vld [vmem:[%s784 + $0x68] sm:$0xff]
      %v799 = vld [vmem:[%s784 + $0x70] sm:$0xff]
      %v800 = vld [vmem:[%s784 + $0x78] sm:$0xff]
      %v801 = vld [vmem:[%s784 + $0x80] sm:$0xff]
      %v802 = vld [vmem:[%s784 + $0x88] sm:$0xff]
      %v803 = vld [vmem:[%s784 + $0x90] sm:$0xff]
      %v804 = vld [vmem:[%s784 + $0x98] sm:$0xff]
      %v805 = vld [vmem:[%s784 + $0xa0] sm:$0xff]
      %v806 = vld [vmem:[%s784 + $0xa8] sm:$0xff]
      %v807 = vld [vmem:[%s784 + $0xb0] sm:$0xff]
      %v808 = vld [vmem:[%s784 + $0xb8] sm:$0xff]
      %v809 = vld [vmem:[%s784 + $0xc0] sm:$0xff]
      %v810 = vld [vmem:[%s784 + $0xc8] sm:$0xff]
      %v811 = vld [vmem:[%s784 + $0xd0] sm:$0xff]
      %v812 = vld [vmem:[%s784 + $0xd8] sm:$0xff]
      %v813 = vld [vmem:[%s784 + $0xe0] sm:$0xff]
      %v814 = vld [vmem:[%s784 + $0xe8] sm:$0xff]
      %v815 = vld [vmem:[%s784 + $0xf0] sm:$0xff]
      %v816 = vld [vmem:[%s784 + $0xf8] sm:$0xff]
      %v817 = vld [vmem:[%s784 + $0x100] sm:$0xff]
      %v818 = vld [vmem:[%s784 + $0x108] sm:$0xff]
      %v819 = vld [vmem:[%s784 + $0x110] sm:$0xff]
      %v820 = vld [vmem:[%s784 + $0x118] sm:$0xff]
      %v821 = vld [vmem:[%s784 + $0x120] sm:$0xff]
      %v822 = vld [vmem:[%s784 + $0x128] sm:$0xff]
      %v823 = vld [vmem:[%s784 + $0x130] sm:$0xff]
      %v824 = vld [vmem:[%s784 + $0x138] sm:$0xff]
      %v825 = vld [vmem:[%s784 + $0x140] sm:$0xff]
      %v826 = vld [vmem:[%s784 + $0x148] sm:$0xff]
      %v827 = vld [vmem:[%s784 + $0x150] sm:$0xff]
      %v828 = vld [vmem:[%s784 + $0x158] sm:$0xff]
      %v829 = vld [vmem:[%s784 + $0x160] sm:$0xff]
      %v830 = vld [vmem:[%s784 + $0x168] sm:$0xff]
      %v831 = vld [vmem:[%s784 + $0x170] sm:$0xff]
      %v832 = vld [vmem:[%s784 + $0x178] sm:$0xff]
      %v833 = vld [vmem:[%s784 + $0x180] sm:$0xff]
      %v834 = vld [vmem:[%s784 + $0x188] sm:$0xff]
      %v835 = vld [vmem:[%s784 + $0x190] sm:$0xff]
      %v836 = vld [vmem:[%s784 + $0x198] sm:$0xff]
      %v837 = vld [vmem:[%s784 + $0x1a0] sm:$0xff]
      %v838 = vld [vmem:[%s784 + $0x1a8] sm:$0xff]
      %v839 = vld [vmem:[%s784 + $0x1b0] sm:$0xff]
      %v840 = vld [vmem:[%s784 + $0x1b8] sm:$0xff]
      %v841 = vld [vmem:[%s784 + $0x1c0] sm:$0xff]
      %v842 = vld [vmem:[%s784 + $0x1c8] sm:$0xff]
      %v843 = vld [vmem:[%s784 + $0x1d0] sm:$0xff]
      %v844 = vld [vmem:[%s784 + $0x1d8] sm:$0xff]
      %v845 = vld [vmem:[%s784 + $0x1e0] sm:$0xff]
      %v846 = vld [vmem:[%s784 + $0x1e8] sm:$0xff]
      %v847 = vld [vmem:[%s784 + $0x1f0] sm:$0xff]
      %v848 = vld [vmem:[%s784 + $0x1f8] sm:$0xff]
      %s849 = scalar_lea.vmem [#allocation9], 4
      %v850 = vld [vmem:[%s849] sm:$0xf]
      %v852 = vlaneseq
      %v853 = vshrl.u32 %v852, 7
      %v854 = vsub.s32 0, %v853
      %v855 = vrot.slane %v850, %v854
      %v856 = vlaneseq
      %v857 = vshrl.u32 %v856, 7
      %v858 = vsub.s32 1, %v857
      %v859 = vrot.slane %v850, %v858
      %v860 = vlaneseq
      %v861 = vshrl.u32 %v860, 7
      %v862 = vsub.s32 2, %v861
      %v863 = vrot.slane %v850, %v862
      %v864 = vlaneseq
      %v865 = vshrl.u32 %v864, 7
      %v866 = vsub.s32 3, %v865
      %v867 = vrot.slane %v850, %v866
      %v936 = vunpack.c.l.b16 %v785
      %v937 = vunpack.c.h.b16 %v785
      %v938 = vunpack.c.l.b16 %v786
      %v939 = vunpack.c.h.b16 %v786
      %v940 = vunpack.c.l.b16 %v787
      %v941 = vunpack.c.h.b16 %v787
      %v942 = vunpack.c.l.b16 %v788
      %v943 = vunpack.c.h.b16 %v788
      %v944 = vunpack.c.l.b16 %v789
      %v945 = vunpack.c.h.b16 %v789
      %v946 = vunpack.c.l.b16 %v790
      %v947 = vunpack.c.h.b16 %v790
      %v948 = vunpack.c.l.b16 %v791
      %v949 = vunpack.c.h.b16 %v791
      %v950 = vunpack.c.l.b16 %v792
      %v951 = vunpack.c.h.b16 %v792
      %v952 = vunpack.c.l.b16 %v793
      %v953 = vunpack.c.h.b16 %v793
      %v954 = vunpack.c.l.b16 %v794
      %v955 = vunpack.c.h.b16 %v794
      %v956 = vunpack.c.l.b16 %v795
      %v957 = vunpack.c.h.b16 %v795
      %v958 = vunpack.c.l.b16 %v796
      %v959 = vunpack.c.h.b16 %v796
      %v960 = vunpack.c.l.b16 %v797
      %v961 = vunpack.c.h.b16 %v797
      %v962 = vunpack.c.l.b16 %v798
      %v963 = vunpack.c.h.b16 %v798
      %v964 = vunpack.c.l.b16 %v799
      %v965 = vunpack.c.h.b16 %v799
      %v966 = vunpack.c.l.b16 %v800
      %v967 = vunpack.c.h.b16 %v800
      %v968 = vunpack.c.l.b16 %v801
      %v969 = vunpack.c.h.b16 %v801
      %v970 = vunpack.c.l.b16 %v802
      %v971 = vunpack.c.h.b16 %v802
      %v972 = vunpack.c.l.b16 %v803
      %v973 = vunpack.c.h.b16 %v803
      %v974 = vunpack.c.l.b16 %v804
      %v975 = vunpack.c.h.b16 %v804
      %v976 = vunpack.c.l.b16 %v805
      %v977 = vunpack.c.h.b16 %v805
      %v978 = vunpack.c.l.b16 %v806
      %v979 = vunpack.c.h.b16 %v806
      %v980 = vunpack.c.l.b16 %v807
      %v981 = vunpack.c.h.b16 %v807
      %v982 = vunpack.c.l.b16 %v808
      %v983 = vunpack.c.h.b16 %v808
      %v984 = vunpack.c.l.b16 %v809
      %v985 = vunpack.c.h.b16 %v809
      %v986 = vunpack.c.l.b16 %v810
      %v987 = vunpack.c.h.b16 %v810
      %v988 = vunpack.c.l.b16 %v811
      %v989 = vunpack.c.h.b16 %v811
      %v990 = vunpack.c.l.b16 %v812
      %v991 = vunpack.c.h.b16 %v812
      %v992 = vunpack.c.l.b16 %v813
      %v993 = vunpack.c.h.b16 %v813
      %v994 = vunpack.c.l.b16 %v814
      %v995 = vunpack.c.h.b16 %v814
      %v996 = vunpack.c.l.b16 %v815
      %v997 = vunpack.c.h.b16 %v815
      %v998 = vunpack.c.l.b16 %v816
      %v999 = vunpack.c.h.b16 %v816
      %v1000 = vunpack.c.l.b16 %v817
      %v1001 = vunpack.c.h.b16 %v817
      %v1002 = vunpack.c.l.b16 %v818
      %v1003 = vunpack.c.h.b16 %v818
      %v1004 = vunpack.c.l.b16 %v819
      %v1005 = vunpack.c.h.b16 %v819
      %v1006 = vunpack.c.l.b16 %v820
      %v1007 = vunpack.c.h.b16 %v820
      %v1008 = vunpack.c.l.b16 %v821
      %v1009 = vunpack.c.h.b16 %v821
      %v1010 = vunpack.c.l.b16 %v822
      %v1011 = vunpack.c.h.b16 %v822
      %v1012 = vunpack.c.l.b16 %v823
      %v1013 = vunpack.c.h.b16 %v823
      %v1014 = vunpack.c.l.b16 %v824
      %v1015 = vunpack.c.h.b16 %v824
      %v1016 = vunpack.c.l.b16 %v825
      %v1017 = vunpack.c.h.b16 %v825
      %v1018 = vunpack.c.l.b16 %v826
      %v1019 = vunpack.c.h.b16 %v826
      %v1020 = vunpack.c.l.b16 %v827
      %v1021 = vunpack.c.h.b16 %v827
      %v1022 = vunpack.c.l.b16 %v828
      %v1023 = vunpack.c.h.b16 %v828
      %v1024 = vunpack.c.l.b16 %v829
      %v1025 = vunpack.c.h.b16 %v829
      %v1026 = vunpack.c.l.b16 %v830
      %v1027 = vunpack.c.h.b16 %v830
      %v1028 = vunpack.c.l.b16 %v831
      %v1029 = vunpack.c.h.b16 %v831
      %v1030 = vunpack.c.l.b16 %v832
      %v1031 = vunpack.c.h.b16 %v832
      %v1032 = vunpack.c.l.b16 %v833
      %v1033 = vunpack.c.h.b16 %v833
      %v1034 = vunpack.c.l.b16 %v834
      %v1035 = vunpack.c.h.b16 %v834
      %v1036 = vunpack.c.l.b16 %v835
      %v1037 = vunpack.c.h.b16 %v835
      %v1038 = vunpack.c.l.b16 %v836
      %v1039 = vunpack.c.h.b16 %v836
      %v1040 = vunpack.c.l.b16 %v837
      %v1041 = vunpack.c.h.b16 %v837
      %v1042 = vunpack.c.l.b16 %v838
      %v1043 = vunpack.c.h.b16 %v838
      %v1044 = vunpack.c.l.b16 %v839
      %v1045 = vunpack.c.h.b16 %v839
      %v1046 = vunpack.c.l.b16 %v840
      %v1047 = vunpack.c.h.b16 %v840
      %v1048 = vunpack.c.l.b16 %v841
      %v1049 = vunpack.c.h.b16 %v841
      %v1050 = vunpack.c.l.b16 %v842
      %v1051 = vunpack.c.h.b16 %v842
      %v1052 = vunpack.c.l.b16 %v843
      %v1053 = vunpack.c.h.b16 %v843
      %v1054 = vunpack.c.l.b16 %v844
      %v1055 = vunpack.c.h.b16 %v844
      %v1056 = vunpack.c.l.b16 %v845
      %v1057 = vunpack.c.h.b16 %v845
      %v1058 = vunpack.c.l.b16 %v846
      %v1059 = vunpack.c.h.b16 %v846
      %v1060 = vunpack.c.l.b16 %v847
      %v1061 = vunpack.c.h.b16 %v847
      %v1062 = vunpack.c.l.b16 %v848
      %v1063 = vunpack.c.h.b16 %v848
      %v1064 = vpack.c.b16 %v940, %v936
      %v1065 = vpack.c.b16 %v941, %v937
      %v1066 = vpack.c.b16 %v942, %v938
      %v1067 = vpack.c.b16 %v943, %v939
      %v1068 = vpack.c.b16 %v948, %v944
      %v1069 = vpack.c.b16 %v949, %v945
      %v1070 = vpack.c.b16 %v950, %v946
      %v1071 = vpack.c.b16 %v951, %v947
      %v1072 = vpack.c.b16 %v956, %v952
      %v1073 = vpack.c.b16 %v957, %v953
      %v1074 = vpack.c.b16 %v958, %v954
      %v1075 = vpack.c.b16 %v959, %v955
      %v1076 = vpack.c.b16 %v964, %v960
      %v1077 = vpack.c.b16 %v965, %v961
      %v1078 = vpack.c.b16 %v966, %v962
      %v1079 = vpack.c.b16 %v967, %v963
      %v1080 = vpack.c.b16 %v972, %v968
      %v1081 = vpack.c.b16 %v973, %v969
      %v1082 = vpack.c.b16 %v974, %v970
      %v1083 = vpack.c.b16 %v975, %v971
      %v1084 = vpack.c.b16 %v980, %v976
      %v1085 = vpack.c.b16 %v981, %v977
      %v1086 = vpack.c.b16 %v982, %v978
      %v1087 = vpack.c.b16 %v983, %v979
      %v1088 = vpack.c.b16 %v988, %v984
      %v1089 = vpack.c.b16 %v989, %v985
      %v1090 = vpack.c.b16 %v990, %v986
      %v1091 = vpack.c.b16 %v991, %v987
      %v1092 = vpack.c.b16 %v996, %v992
      %v1093 = vpack.c.b16 %v997, %v993
      %v1094 = vpack.c.b16 %v998, %v994
      %v1095 = vpack.c.b16 %v999, %v995
      %v1096 = vpack.c.b16 %v1004, %v1000
      %v1097 = vpack.c.b16 %v1005, %v1001
      %v1098 = vpack.c.b16 %v1006, %v1002
      %v1099 = vpack.c.b16 %v1007, %v1003
      %v1100 = vpack.c.b16 %v1012, %v1008
      %v1101 = vpack.c.b16 %v1013, %v1009
      %v1102 = vpack.c.b16 %v1014, %v1010
      %v1103 = vpack.c.b16 %v1015, %v1011
      %v1104 = vpack.c.b16 %v1020, %v1016
      %v1105 = vpack.c.b16 %v1021, %v1017
      %v1106 = vpack.c.b16 %v1022, %v1018
      %v1107 = vpack.c.b16 %v1023, %v1019
      %v1108 = vpack.c.b16 %v1028, %v1024
      %v1109 = vpack.c.b16 %v1029, %v1025
      %v1110 = vpack.c.b16 %v1030, %v1026
      %v1111 = vpack.c.b16 %v1031, %v1027
      %v1112 = vpack.c.b16 %v1036, %v1032
      %v1113 = vpack.c.b16 %v1037, %v1033
      %v1114 = vpack.c.b16 %v1038, %v1034
      %v1115 = vpack.c.b16 %v1039, %v1035
      %v1116 = vpack.c.b16 %v1044, %v1040
      %v1117 = vpack.c.b16 %v1045, %v1041
      %v1118 = vpack.c.b16 %v1046, %v1042
      %v1119 = vpack.c.b16 %v1047, %v1043
      %v1120 = vpack.c.b16 %v1052, %v1048
      %v1121 = vpack.c.b16 %v1053, %v1049
      %v1122 = vpack.c.b16 %v1054, %v1050
      %v1123 = vpack.c.b16 %v1055, %v1051
      %v1124 = vpack.c.b16 %v1060, %v1056
      %v1125 = vpack.c.b16 %v1061, %v1057
      %v1126 = vpack.c.b16 %v1062, %v1058
      %v1127 = vpack.c.b16 %v1063, %v1059
      %1192 = vmatprep.subr.bf16.mxu0 %v1065
      %1193 = vmatpush1.bf16.msra.mxu0 %v1064
      %1194 = vmatprep.subr.bf16.mxu0 %v1069
      %1195 = vmatpush1.bf16.msra.mxu0 %v1068
      %1196 = vmatprep.subr.bf16.mxu0 %v1073
      %1197 = vmatpush1.bf16.msra.mxu0 %v1072
      %1198 = vmatprep.subr.bf16.mxu0 %v1077
      %1199 = vmatpush1.bf16.msra.mxu0 %v1076
      %1200 = vmatprep.subr.bf16.mxu0 %v1081
      %1201 = vmatpush1.bf16.msra.mxu0 %v1080
      %1202 = vmatprep.subr.bf16.mxu0 %v1085
      %1203 = vmatpush1.bf16.msra.mxu0 %v1084
      %1204 = vmatprep.subr.bf16.mxu0 %v1089
      %1205 = vmatpush1.bf16.msra.mxu0 %v1088
      %1206 = vmatprep.subr.bf16.mxu0 %v1093
      %1207 = vmatpush1.bf16.msra.mxu0 %v1092
      %1208 = vmatprep.subr.bf16.mxu0 %v1097
      %1209 = vmatpush1.bf16.msra.mxu0 %v1096
      %1210 = vmatprep.subr.bf16.mxu0 %v1101
      %1211 = vmatpush1.bf16.msra.mxu0 %v1100
      %1212 = vmatprep.subr.bf16.mxu0 %v1105
      %1213 = vmatpush1.bf16.msra.mxu0 %v1104
      %1214 = vmatprep.subr.bf16.mxu0 %v1109
      %1215 = vmatpush1.bf16.msra.mxu0 %v1108
      %1216 = vmatprep.subr.bf16.mxu0 %v1113
      %1217 = vmatpush1.bf16.msra.mxu0 %v1112
      %1218 = vmatprep.subr.bf16.mxu0 %v1117
      %1219 = vmatpush1.bf16.msra.mxu0 %v1116
      %1220 = vmatprep.subr.bf16.mxu0 %v1121
      %1221 = vmatpush1.bf16.msra.mxu0 %v1120
      %1222 = vmatprep.subr.bf16.mxu0 %v1125
      %1223 = vmatpush1.bf16.msra.mxu0 %v1124
      %1224 = vmatprep.mubr.bf16.mxu0 %v783
      %1225 = vmatmul.mubr.bf16.gmra.mrb[0].mxu0 %v782
      %v1226 = vpop.f32.mrb[0].mxu0
      %v1227 = vadd.f32 %v855, %v1226
      %v1228 = vpop.f32.mrb[0].mxu0
      %v1229 = vadd.f32 %v859, %v1228
      %v1230 = vpop.f32.mrb[0].mxu0
      %v1231 = vadd.f32 %v855, %v1230
      %v1232 = vpop.f32.mrb[0].mxu0
      %v1233 = vadd.f32 %v859, %v1232
      %1234 = vdwg.mxu0
      %1235 = vmatprep.subr.bf16.mxu0 %v1067
      %1236 = vmatpush1.bf16.msra.mxu0 %v1066
      %1237 = vmatprep.subr.bf16.mxu0 %v1071
      %1238 = vmatpush1.bf16.msra.mxu0 %v1070
      %1239 = vmatprep.subr.bf16.mxu0 %v1075
      %1240 = vmatpush1.bf16.msra.mxu0 %v1074
      %1241 = vmatprep.subr.bf16.mxu0 %v1079
      %1242 = vmatpush1.bf16.msra.mxu0 %v1078
      %1243 = vmatprep.subr.bf16.mxu0 %v1083
      %1244 = vmatpush1.bf16.msra.mxu0 %v1082
      %1245 = vmatprep.subr.bf16.mxu0 %v1087
      %1246 = vmatpush1.bf16.msra.mxu0 %v1086
      %1247 = vmatprep.subr.bf16.mxu0 %v1091
      %1248 = vmatpush1.bf16.msra.mxu0 %v1090
      %1249 = vmatprep.subr.bf16.mxu0 %v1095
      %1250 = vmatpush1.bf16.msra.mxu0 %v1094
      %1251 = vmatprep.subr.bf16.mxu0 %v1099
      %1252 = vmatpush1.bf16.msra.mxu0 %v1098
      %1253 = vmatprep.subr.bf16.mxu0 %v1103
      %1254 = vmatpush1.bf16.msra.mxu0 %v1102
      %1255 = vmatprep.subr.bf16.mxu0 %v1107
      %1256 = vmatpush1.bf16.msra.mxu0 %v1106
      %1257 = vmatprep.subr.bf16.mxu0 %v1111
      %1258 = vmatpush1.bf16.msra.mxu0 %v1110
      %1259 = vmatprep.subr.bf16.mxu0 %v1115
      %1260 = vmatpush1.bf16.msra.mxu0 %v1114
      %1261 = vmatprep.subr.bf16.mxu0 %v1119
      %1262 = vmatpush1.bf16.msra.mxu0 %v1118
      %1263 = vmatprep.subr.bf16.mxu0 %v1123
      %1264 = vmatpush1.bf16.msra.mxu0 %v1122
      %1265 = vmatprep.subr.bf16.mxu0 %v1127
      %1266 = vmatpush1.bf16.msra.mxu0 %v1126
      %1267 = vmatprep.mubr.bf16.mxu0 %v783
      %1268 = vmatmul.mubr.bf16.gmra.mrb[0].mxu0 %v782
      %v1269 = vpop.f32.mrb[0].mxu0
      %v1270 = vadd.f32 %v863, %v1269
      %v1271 = vpop.f32.mrb[0].mxu0
      %v1272 = vadd.f32 %v867, %v1271
      %v1273 = vpop.f32.mrb[0].mxu0
      %v1274 = vadd.f32 %v863, %v1273
      %v1275 = vpop.f32.mrb[0].mxu0
      %v1276 = vadd.f32 %v867, %v1275
      %1277 = vdwg.mxu0
      %v1278 = vxor.u32 %v1227, 2147483648
      %v1279 = vxor.u32 %v1231, 2147483648
      %v1280 = vmul.f32 %v1278, 1.442695
      %v1281 = vpow.pop %v1280
      %v1282 = vmul.f32 %v1279, 1.442695
      %v1283 = vpow.pop %v1282
      %v1284 = vadd.f32 %v1281, 1.0
      %v1285 = vadd.f32 %v1283, 1.0
      %v1286 = vrcp.pop %v1284
      %v1287 = vmul.f32 1.0, %v1286
      %v1288 = vrcp.pop %v1285
      %v1289 = vmul.f32 1.0, %v1288
      %v1290 = vxor.u32 %v1229, 2147483648
      %v1291 = vxor.u32 %v1233, 2147483648
      %v1292 = vmul.f32 %v1290, 1.442695
      %v1293 = vpow.pop %v1292
      %v1294 = vmul.f32 %v1291, 1.442695
      %v1295 = vpow.pop %v1294
      %v1296 = vadd.f32 %v1293, 1.0
      %v1297 = vadd.f32 %v1295, 1.0
      %v1298 = vrcp.pop %v1296
      %v1299 = vmul.f32 1.0, %v1298
      %v1300 = vrcp.pop %v1297
      %v1301 = vmul.f32 1.0, %v1300
      %v1302 = vtanh.pop %v1270
      %v1303 = vtanh.pop %v1274
      %v1304 = vxor.u32 %v1272, 2147483648
      %v1305 = vxor.u32 %v1276, 2147483648
      %v1306 = vmul.f32 %v1304, 1.442695
      %v1307 = vpow.pop %v1306
      %v1308 = vmul.f32 %v1305, 1.442695
      %v1309 = vpow.pop %v1308
      %v1310 = vadd.f32 %v1307, 1.0
      %v1311 = vadd.f32 %v1309, 1.0
      %v1312 = vrcp.pop %v1310
      %v1313 = vmul.f32 1.0, %v1312
      %v1314 = vrcp.pop %v1311
      %v1315 = vmul.f32 1.0, %v1314
      %v1316 = vmul.f32 %v1299, %v776
      %v1317 = vmul.f32 %v1301, %v777
      %v1318 = vmul.f32 %v1287, %v1302
      %v1319 = vmul.f32 %v1289, %v1303
      %v1320 = vadd.f32 %v1316, %v1318
      %v1321 = vadd.f32 %v1317, %v1319
      %v1322 = vtanh.pop %v1320
      %v1323 = vtanh.pop %v1321
      %v1324 = vmul.f32 %v1313, %v1322
      %v1325 = vmul.f32 %v1315, %v1323
      %1326 = vst [vmem:[%s772] sm:$0xff] %v1324
      %1327 = vst [vmem:[%s772 + $0x8] sm:$0xff] %v1325
      %1328 = vst [vmem:[%s775] sm:$0xff] %v1320
      %1329 = vst [vmem:[%s775 + $0x8] sm:$0xff] %v1321
      %v1330 = vpack.c.bf16 %v1325, %v1324
      %v1331 = vld [vmem:[%s6] sm:$0xff]
      %v1332 = vld [vmem:[%s6 + $0x8] sm:$0xff]
      %v1333 = vld [vmem:[%s6 + $0x10] sm:$0xff]
      %v1334 = vld [vmem:[%s6 + $0x18] sm:$0xff]
      %v1335 = vld [vmem:[%s6 + $0x20] sm:$0xff]
      %v1336 = vld [vmem:[%s6 + $0x28] sm:$0xff]
      %v1337 = vld [vmem:[%s6 + $0x30] sm:$0xff]
      %v1338 = vld [vmem:[%s6 + $0x38] sm:$0xff]
      %v1339 = vld [vmem:[%s6 + $0x40] sm:$0xff]
      %v1340 = vld [vmem:[%s6 + $0x48] sm:$0xff]
      %v1341 = vld [vmem:[%s6 + $0x50] sm:$0xff]
      %v1342 = vld [vmem:[%s6 + $0x58] sm:$0xff]
      %v1343 = vld [vmem:[%s6 + $0x60] sm:$0xff]
      %v1344 = vld [vmem:[%s6 + $0x68] sm:$0xff]
      %v1345 = vld [vmem:[%s6 + $0x70] sm:$0xff]
      %v1346 = vld [vmem:[%s6 + $0x78] sm:$0xff]
      %v1347 = vld [vmem:[%s7] sm:$0x3]
      %v1349 = vlaneseq
      %v1350 = vshrl.u32 %v1349, 7
      %v1351 = vsub.s32 0, %v1350
      %v1352 = vrot.slane %v1347, %v1351
      %v1353 = vlaneseq
      %v1354 = vshrl.u32 %v1353, 7
      %v1355 = vsub.s32 1, %v1354
      %v1356 = vrot.slane %v1347, %v1355
      %v1375 = vunpack.c.l.b16 %v1331
      %v1376 = vunpack.c.h.b16 %v1331
      %v1377 = vunpack.c.l.b16 %v1332
      %v1378 = vunpack.c.h.b16 %v1332
      %v1379 = vunpack.c.l.b16 %v1333
      %v1380 = vunpack.c.h.b16 %v1333
      %v1381 = vunpack.c.l.b16 %v1334
      %v1382 = vunpack.c.h.b16 %v1334
      %v1383 = vunpack.c.l.b16 %v1335
      %v1384 = vunpack.c.h.b16 %v1335
      %v1385 = vunpack.c.l.b16 %v1336
      %v1386 = vunpack.c.h.b16 %v1336
      %v1387 = vunpack.c.l.b16 %v1337
      %v1388 = vunpack.c.h.b16 %v1337
      %v1389 = vunpack.c.l.b16 %v1338
      %v1390 = vunpack.c.h.b16 %v1338
      %v1391 = vunpack.c.l.b16 %v1339
      %v1392 = vunpack.c.h.b16 %v1339
      %v1393 = vunpack.c.l.b16 %v1340
      %v1394 = vunpack.c.h.b16 %v1340
      %v1395 = vunpack.c.l.b16 %v1341
      %v1396 = vunpack.c.h.b16 %v1341
      %v1397 = vunpack.c.l.b16 %v1342
      %v1398 = vunpack.c.h.b16 %v1342
      %v1399 = vunpack.c.l.b16 %v1343
      %v1400 = vunpack.c.h.b16 %v1343
      %v1401 = vunpack.c.l.b16 %v1344
      %v1402 = vunpack.c.h.b16 %v1344
      %v1403 = vunpack.c.l.b16 %v1345
      %v1404 = vunpack.c.h.b16 %v1345
      %v1405 = vunpack.c.l.b16 %v1346
      %v1406 = vunpack.c.h.b16 %v1346
      %v1407 = vpack.c.b16 %v1377, %v1375
      %v1408 = vpack.c.b16 %v1378, %v1376
      %v1409 = vpack.c.b16 %v1381, %v1379
      %v1410 = vpack.c.b16 %v1382, %v1380
      %v1411 = vpack.c.b16 %v1385, %v1383
      %v1412 = vpack.c.b16 %v1386, %v1384
      %v1413 = vpack.c.b16 %v1389, %v1387
      %v1414 = vpack.c.b16 %v1390, %v1388
      %v1415 = vpack.c.b16 %v1393, %v1391
      %v1416 = vpack.c.b16 %v1394, %v1392
      %v1417 = vpack.c.b16 %v1397, %v1395
      %v1418 = vpack.c.b16 %v1398, %v1396
      %v1419 = vpack.c.b16 %v1401, %v1399
      %v1420 = vpack.c.b16 %v1402, %v1400
      %v1421 = vpack.c.b16 %v1405, %v1403
      %v1422 = vpack.c.b16 %v1406, %v1404
      %1439 = vmatprep.subr.bf16.mxu0 %v1408
      %1440 = vmatpush1.bf16.msra.mxu0 %v1407
      %1441 = vmatprep.subr.bf16.mxu0 %v1410
      %1442 = vmatpush1.bf16.msra.mxu0 %v1409
      %1443 = vmatprep.subr.bf16.mxu0 %v1412
      %1444 = vmatpush1.bf16.msra.mxu0 %v1411
      %1445 = vmatprep.subr.bf16.mxu0 %v1414
      %1446 = vmatpush1.bf16.msra.mxu0 %v1413
      %1447 = vmatprep.subr.bf16.mxu0 %v1416
      %1448 = vmatpush1.bf16.msra.mxu0 %v1415
      %1449 = vmatprep.subr.bf16.mxu0 %v1418
      %1450 = vmatpush1.bf16.msra.mxu0 %v1417
      %1451 = vmatprep.subr.bf16.mxu0 %v1420
      %1452 = vmatpush1.bf16.msra.mxu0 %v1419
      %1453 = vmatprep.subr.bf16.mxu0 %v1422
      %1454 = vmatpush1.bf16.msra.mxu0 %v1421
      %1455 = vmatprep.subr.bf16.mxu0 0
      %1456 = vmatpush1.bf16.msra.mxu0 0
      %1457 = vmatprep.subr.bf16.mxu0 0
      %1458 = vmatpush1.bf16.msra.mxu0 0
      %1459 = vmatprep.subr.bf16.mxu0 0
      %1460 = vmatpush1.bf16.msra.mxu0 0
      %1461 = vmatprep.subr.bf16.mxu0 0
      %1462 = vmatpush1.bf16.msra.mxu0 0
      %1463 = vmatprep.subr.bf16.mxu0 0
      %1464 = vmatpush1.bf16.msra.mxu0 0
      %1465 = vmatprep.subr.bf16.mxu0 0
      %1466 = vmatpush1.bf16.msra.mxu0 0
      %1467 = vmatprep.subr.bf16.mxu0 0
      %1468 = vmatpush1.bf16.msra.mxu0 0
      %1469 = vmatprep.subr.bf16.mxu0 0
      %1470 = vmatpush1.bf16.msra.mxu0 0
      %1471 = vmatprep.mubr.bf16.mxu0 0
      %1472 = vmatmul.mubr.bf16.gmra.mrb[0].mxu0 %v1330
      %v1473 = vpop.f32.mrb[0].mxu0
      %v1474 = vadd.f32 %v1352, %v1473
      %v1475 = vpop.f32.mrb[0].mxu0
      %v1476 = vadd.f32 %v1356, %v1475
      %v1477 = vpop.f32.mrb[0].mxu0
      %v1478 = vadd.f32 %v1352, %v1477
      %v1479 = vpop.f32.mrb[0].mxu0
      %v1480 = vadd.f32 %v1356, %v1479
      %1481 = vdwg.mxu0
      %s1482 = scalar_lea.vmem [#allocation6], %s145
      %v1483 = vld [vmem:[%s1482] sm:$0xff]
      %v1484 = vld [vmem:[%s1482 + $0x8] sm:$0xff]
      %v1485 = vmul.f32 %v1476, 0.5
      %v1486 = vmul.f32 %v1480, 0.5
      %v1487 = vmul.f32 %v1485, 1.442695
      %v1488 = vpow.pop %v1487
      %v1489 = vmul.f32 %v1486, 1.442695
      %v1490 = vpow.pop %v1489
      %v1491 = vmul.f32 %v1483, %v1488
      %v1492 = vmul.f32 %v1484, %v1490
      %v1493 = vadd.f32 %v1491, %v1474
      %v1494 = vadd.f32 %v1492, %v1478
      %s1495 = smul.u32 %s140, 6
      %s1496 = smul.addr %s1495, 8
      %s1497 = scalar_lea.vmem [#allocation14], %s1496
      %1498 = vst [vmem:[%s1497] sm:$0xff] %v1493
      %1499 = vst [vmem:[%s1497 + $0x8] sm:$0xff] %v1474
      %1500 = vst [vmem:[%s1497 + $0x10] sm:$0xff] %v1476
      %1501 = vst [vmem:[%s1497 + $0x18] sm:$0xff] %v1494
      %1502 = vst [vmem:[%s1497 + $0x20] sm:$0xff] %v1478
      %1503 = vst [vmem:[%s1497 + $0x28] sm:$0xff] %v1480
    $region70: #{tpu_custom_call.1} parent=1 // loop_footer
      %s144 = sadd.s32 1, %s140
    $region71: #{tpu_custom_call.1} parent=1 // loop_footer_branch
      %139 = sbr.rel target = $region67
    $region72: #{tpu_custom_call.1} parent=1 // loop_exit
      _
    // Predicated region
    $region73: #{tpu_custom_call.1} parent=1 // pred_check
      _
    $region74: #{tpu_custom_call.1} parent=1 // pred_check_branch
      %1505 = sbr.rel (0) target = $region76
    $region75: #{tpu_custom_call.1} parent=1 // pred_region
      %s1507 = ssub.s32 3072, 3072
      %1508 = vsyncadd [#allocation5], %s1507
      %s1509 = sshll.u32 [#allocation14], 4
      %s1510 = int_to_ptr.vmem [resolvable:$true] %s1509
      %1515 = dma.vmem_to_hbm [thread:$0]  %s1510, 3072, %s10, [#allocation5], 384, 384, 24
    $region76: #{tpu_custom_call.1} parent=1 // pred_fallthru
      _
    // Predicated region
    $region77: #{tpu_custom_call.1} parent=1 // pred_check
      _
    $region78: #{tpu_custom_call.1} parent=1 // pred_check_branch
      %1517 = sbr.rel (0) target = $region80
    $region79: #{tpu_custom_call.1} parent=1 // pred_region
      %s1519 = ssub.s32 512, 512
      %1520 = vsyncadd [#allocation16], %s1519
      %s1521 = sshll.u32 [#allocation15], 4
      %s1522 = int_to_ptr.vmem [resolvable:$true] %s1521
      %1527 = dma.vmem_to_hbm [thread:$0]  %s1522, 512, %s11, [#allocation16], 128, 128, 8
    $region80: #{tpu_custom_call.1} parent=1 // pred_fallthru
      _
    // Predicated region
    $region81: #{tpu_custom_call.1} parent=1 // pred_check
      _
    $region82: #{tpu_custom_call.1} parent=1 // pred_check_branch
      %1529 = sbr.rel (0) target = $region84
    $region83: #{tpu_custom_call.1} parent=1 // pred_region
      %s1531 = ssub.s32 512, 512
      %1532 = vsyncadd [#allocation16], %s1531
      %s1533 = sshll.u32 [#allocation17], 4
      %s1534 = int_to_ptr.vmem [resolvable:$true] %s1533
      %1539 = dma.vmem_to_hbm [thread:$0]  %s1534, 512, %s12, [#allocation16], 128, 128, 8
    $region84: #{tpu_custom_call.1} parent=1 // pred_fallthru
      _
    // Predicated region
    $region85: #{tpu_custom_call.1} parent=1 // pred_check
      _
    $region86: #{tpu_custom_call.1} parent=1 // pred_check_branch
      %1541 = sbr.rel (0) target = $region88
    $region87: #{tpu_custom_call.1} parent=1 // pred_region
      %1542 = dma.done [#allocation5], 3072
    $region88: #{tpu_custom_call.1} parent=1 // pred_fallthru
      _
    // Predicated region
    $region89: #{tpu_custom_call.1} parent=1 // pred_check
      _
    $region90: #{tpu_custom_call.1} parent=1 // pred_check_branch
      %1544 = sbr.rel (0) target = $region92
    $region91: #{tpu_custom_call.1} parent=1 // pred_region
      %1545 = dma.done [#allocation16], 512
    $region92: #{tpu_custom_call.1} parent=1 // pred_fallthru
      _
    // Predicated region
    $region93: #{tpu_custom_call.1} parent=1 // pred_check
      _
    $region94: #{tpu_custom_call.1} parent=1 // pred_check_branch
      %1547 = sbr.rel (0) target = $region96
    $region95: #{tpu_custom_call.1} parent=1 // pred_region
      %1548 = dma.done [#allocation16], 512
    $region96: #{tpu_custom_call.1} parent=1 // pred_fallthru
      _
    %1549 = vsyncpa [#allocation4], 1
    %1550 = vsyncpa [#allocation7], 1
    %1551 = vsyncpa [#allocation10], 1
    %1552 = vsyncpa [#allocation13], 1
    %1553 = vsyncpa [#allocation5], 1
    %1554 = vsyncpa [#allocation16], 1

</llo_original>
